<compile_context>
chip_gen: v5e
topology: v5e:2x2
jax: 0.10.0
libtpu: 0.0.40
codegen_flags: <defaults>
</compile_context>

<pallas_src>
import functools

import jax
import jax.numpy as jnp
from jax import lax
from jax.experimental import pallas as pl
from jax.experimental.pallas import tpu as pltpu

# ----------------------------- config (small) --------------------------------
DIM = 32                 # hidden size
NUM_HEADS = 2
HEAD_DIM = 16            # NUM_HEADS * HEAD_DIM == DIM
TIME_EMBED_DIM = 16
FF_INNER = 4 * DIM       # FeedForward default inner_dim
NORM_EPS = 1e-5
QK_EPS = 1e-6
BATCH = 2
TEXT_SEQ = 8
VID_SEQ = 16


# ------------------------------ small helpers --------------------------------
def _silu(x):
    return x * jax.nn.sigmoid(x)


def _gelu_tanh(x):
    c = 0.7978845608028654  # sqrt(2/pi)
    return 0.5 * x * (1.0 + jnp.tanh(c * (x + 0.044715 * x * x * x)))


def _layer_norm(x, w, b, eps):
    mu = jnp.mean(x, axis=-1, keepdims=True)
    xc = x - mu
    var = jnp.mean(xc * xc, axis=-1, keepdims=True)
    return xc * lax.rsqrt(var + eps) * w + b


# ------------------------------- Pallas kernel --------------------------------
def _cogvideox_block_kernel(
    x_ref,      # (1, S, D)   this batch's rows = [text (St) ; video (Sv)]
    temb_ref,   # (B, T)      full; row selected by program_id
    ada_ref,    # (T+1, 12D)  [adaLN weight rows ; adaLN bias row]
    w1_ref,     # (D+1, 8D)   [wq|wk|wv|wo|ff_w1 ; ff_b2|0|bo|ff_b1]
    w2_ref,     # (4D+D+H+8, D) [ff_w2 ; havg ; head masks ; ln/qk-norm vectors]
    h_out_ref,  # (1, Sv, D)
    e_out_ref,  # (1, St, D)
    *,
    text_seq, num_heads, ff_inner,
):
    _, S, D = x_ref.shape
    St = text_seq
    H = num_heads
    FF = ff_inner
    T = ada_ref.shape[0] - 1
    b = pl.program_id(0)

    x = x_ref[0]                                                   # (S, D)

    # --- small-vector rows of the w2 slab (constants; loaded, never rebuilt) --
    vb = FF + D + H
    ln1_w = w2_ref[vb + 0:vb + 1, :]
    ln1_b = w2_ref[vb + 1:vb + 2, :]
    nq_w = w2_ref[vb + 4:vb + 5, :]   # tiled over heads, softmax 1/sqrt(Dh) folded in
    nq_b = w2_ref[vb + 5:vb + 6, :]
    nk_w = w2_ref[vb + 6:vb + 7, :]   # tiled over heads
    nk_b = w2_ref[vb + 7:vb + 8, :]

    # ---------------- fused adaLN-Zero linear (norm1 + norm2) ----------------
    t_act = _silu(temb_ref[pl.ds(b, 1), :])                        # (1, T)
    emb = jnp.dot(t_act, ada_ref[0:T, :],
                  preferred_element_type=jnp.float32) + ada_ref[T:T + 1, :]   # (1, 12D)

    # text rows are [0, St), video rows are [St, S): one tiny (S,1) iota only.
    ridx = lax.broadcasted_iota(jnp.int32, (S, 1), 0)
    is_txt = (ridx < St).astype(jnp.float32)                       # (S, 1)
    is_vid = 1.0 - is_txt

    def mod_chunk(c):
        # video chunks live in emb cols [c*D:(c+1)*D), text chunks 6D later.
        return (is_vid * emb[:, c * D:(c + 1) * D]
                + is_txt * emb[:, (6 + c) * D:(7 + c) * D])        # (S, D)

    # ---------------- norm1 + joint self-attention ----------------
    shift1 = mod_chunk(0)
    scale1 = mod_chunk(1)
    xn = _layer_norm(x, ln1_w, ln1_b, NORM_EPS) * (1.0 + scale1) + shift1

    qkv = jnp.dot(xn, w1_ref[0:D, 0:3 * D],
                  preferred_element_type=jnp.float32)              # (S, 3D)
    q, k, v = qkv[:, 0:D], qkv[:, D:2 * D], qkv[:, 2 * D:3 * D]

    # Per-head layer-norm of q/k via the precomputed (D,D) block-averaging
    # matrix (one MXU pass for the mean, one for the variance).
    havg = w2_ref[FF:FF + D, :]                                    # (D, D)

    def head_layer_norm(u, w, bias):
        mu = jnp.dot(u, havg, preferred_element_type=jnp.float32)
        uc = u - mu
        var = jnp.dot(uc * uc, havg, preferred_element_type=jnp.float32)
        return uc * lax.rsqrt(var + QK_EPS) * w + bias

    qn = head_layer_norm(q, nq_w, nq_b)   # includes the 1/sqrt(Dh) softmax scale
    kn = head_layer_norm(k, nk_w, nk_b)

    # Per-head attention over this batch only: no block-diagonal bias needed.
    attn = jnp.zeros((S, D), jnp.float32)
    for h in range(H):                                             # static, H is tiny
        hm = w2_ref[FF + D + h:FF + D + h + 1, :]                  # (1, D) head lane mask
        s = lax.dot_general(qn * hm, kn, (((1,), (1,)), ((), ())),
                            preferred_element_type=jnp.float32)    # (S, S)
        s = s - jnp.max(s, axis=-1, keepdims=True)
        p = jnp.exp(s)
        p = p * pl.reciprocal(jnp.sum(p, axis=-1, keepdims=True), approx=True)
        attn = attn + jnp.dot(p, v * hm, preferred_element_type=jnp.float32)

    attn = (jnp.dot(attn, w1_ref[0:D, 3 * D:4 * D],
                    preferred_element_type=jnp.float32)
            + w1_ref[D:D + 1, 3 * D:4 * D])                        # out proj + bias
    gate1 = mod_chunk(2)                                           # deferred past attention
    x1 = x + gate1 * attn

    # ---------------- norm2 + feed-forward (modulation deferred) ----------------
    ln2_w = w2_ref[vb + 2:vb + 3, :]
    ln2_b = w2_ref[vb + 3:vb + 4, :]
    shift2, scale2, gate2 = mod_chunk(3), mod_chunk(4), mod_chunk(5)

    xn2 = _layer_norm(x1, ln2_w, ln2_b, NORM_EPS) * (1.0 + scale2) + shift2
    f = (jnp.dot(xn2, w1_ref[0:D, 4 * D:4 * D + FF],
                 preferred_element_type=jnp.float32)
         + w1_ref[D:D + 1, 4 * D:4 * D + FF])                      # ff_w1 + ff_b1
    f = _gelu_tanh(f)
    f = (jnp.dot(f, w2_ref[0:FF, :], preferred_element_type=jnp.float32)
         + w1_ref[D:D + 1, 0:D])                                   # ff_w2 + ff_b2
    y = x1 + gate2 * f

    e_out_ref[0] = y[0:St].astype(e_out_ref.dtype)
    h_out_ref[0] = y[St:S].astype(h_out_ref.dtype)


# ------------------------------ parameter packing ------------------------------
def pack_params(p):
    D, H, Dh = DIM, NUM_HEADS, HEAD_DIM
    q_scale = Dh ** -0.5

    # AdaLN linear packed once for both norms, grouped by token segment:
    #   cols [0 : 6D)  -> video/"hidden" set = [n1.(shift,scale,gate), n2.(shift,scale,gate)]
    #   cols [6D:12D)  -> text/"encoder" set = same six chunks
    ada_w = jnp.concatenate(
        [p["n1_lin_w"][:, 0:3 * D], p["n2_lin_w"][:, 0:3 * D],
         p["n1_lin_w"][:, 3 * D:6 * D], p["n2_lin_w"][:, 3 * D:6 * D]], axis=1)
    ada_b = jnp.concatenate(
        [p["n1_lin_b"][:, 0:3 * D], p["n2_lin_b"][:, 0:3 * D],
         p["n1_lin_b"][:, 3 * D:6 * D], p["n2_lin_b"][:, 3 * D:6 * D]], axis=1)
    ada = jnp.concatenate([ada_w, ada_b], axis=0)                      # (T+1, 12D)

    # Big matmul slab: rows 0:D are weights, row D carries the small biases.
    w1_top = jnp.concatenate(
        [p["wq"], p["wk"], p["wv"], p["wo"], p["ff_w1"]], axis=1)      # (D, 4D+FF)
    w1_bot = jnp.concatenate(
        [p["ff_b2"], jnp.zeros((1, 2 * D), jnp.float32), p["bo"], p["ff_b1"]], axis=1)
    w1 = jnp.concatenate([w1_top, w1_bot], axis=0)                     # (D+1, 4D+FF)

    # Row-stacked slab (width D): ff_w2, the per-head block-averaging matrix,
    # the per-head lane masks, and the 8 layer-norm / qk-norm vectors.
    head_of_lane = jnp.arange(D) // Dh
    havg = (head_of_lane[:, None] == head_of_lane[None, :]).astype(jnp.float32) / Dh
    head_masks = (head_of_lane[None, :] == jnp.arange(H)[:, None]).astype(jnp.float32)
    nq_w = jnp.tile(p["nq_w"], (1, H)) * q_scale   # fold softmax 1/sqrt(Dh) into q's affine
    nq_b = jnp.tile(p["nq_b"], (1, H)) * q_scale
    nk_w = jnp.tile(p["nk_w"], (1, H))
    nk_b = jnp.tile(p["nk_b"], (1, H))
    w2 = jnp.concatenate(
        [p["ff_w2"], havg, head_masks,
         p["n1_ln_w"], p["n1_ln_b"], p["n2_ln_w"], p["n2_ln_b"],
         nq_w, nq_b, nk_w, nk_b], axis=0)                              # (FF+D+H+8, D)

    return {"ada": ada, "w1": w1, "w2": w2}


# --------------------------------- wrapper ------------------------------------
def cogvideox_block(hidden_states, encoder_hidden_states, temb, params):
    B, Sv, D = hidden_states.shape
    St = encoder_hidden_states.shape[1]
    S = St + Sv
    T = temb.shape[1]

    kp = pack_params(params)

    # [text; video] per batch; each grid step consumes one batch's (S, D) block.
    x = jnp.concatenate([encoder_hidden_states, hidden_states], axis=1)   # (B, S, D)

    kernel = functools.partial(
        _cogvideox_block_kernel,
        text_seq=St, num_heads=NUM_HEADS, ff_inner=FF_INNER)

    hidden_out, encoder_out = pl.pallas_call(
        kernel,
        out_shape=(
            jax.ShapeDtypeStruct((B, Sv, D), hidden_states.dtype),
            jax.ShapeDtypeStruct((B, St, D), encoder_hidden_states.dtype),
        ),
        grid=(B,),
        in_specs=[
            pl.BlockSpec((1, S, D), lambda b: (b, 0, 0)),
            pl.BlockSpec((B, T), lambda b: (0, 0)),          # full; row picked in-kernel
            pl.BlockSpec(kp["ada"].shape, lambda b: (0, 0)),
            pl.BlockSpec(kp["w1"].shape, lambda b: (0, 0)),
            pl.BlockSpec(kp["w2"].shape, lambda b: (0, 0)),
        ],
        out_specs=(
            pl.BlockSpec((1, Sv, D), lambda b: (b, 0, 0)),
            pl.BlockSpec((1, St, D), lambda b: (b, 0, 0)),
        ),
        compiler_params=pltpu.CompilerParams(dimension_semantics=("parallel",)),
    )(x, temb, kp["ada"], kp["w1"], kp["w2"])

    routing_weights = None   # non-MoE FeedForward -> matches the torch branch
    return hidden_out, encoder_out, routing_weights


# ------------------------------ pure-JAX reference ----------------------------
def reference_block(h, e, temb, p):
    def ln(x, w, b, eps):
        mu = jnp.mean(x, -1, keepdims=True)
        var = jnp.mean((x - mu) ** 2, -1, keepdims=True)
        return (x - mu) / jnp.sqrt(var + eps) * w + b

    St = e.shape[1]
    t = _silu(temb)

    def norm_zero(lw, lb, w, b, h_in, e_in):
        emb = t @ lw + lb                                        # (B, 6D)
        shift, scale, gate, es, esc, eg = jnp.split(emb, 6, axis=-1)
        nh = ln(h_in, w, b, NORM_EPS) * (1 + scale[:, None, :]) + shift[:, None, :]
        ne = ln(e_in, w, b, NORM_EPS) * (1 + esc[:, None, :]) + es[:, None, :]
        return nh, ne, gate[:, None, :], eg[:, None, :]

    nh, ne, g, eg = norm_zero(p["n1_lin_w"], p["n1_lin_b"], p["n1_ln_w"], p["n1_ln_b"], h, e)
    x = jnp.concatenate([ne, nh], axis=1)
    q = x @ p["wq"]; k = x @ p["wk"]; v = x @ p["wv"]
    Bx, S, _ = q.shape
    q = q.reshape(Bx, S, NUM_HEADS, HEAD_DIM).transpose(0, 2, 1, 3)
    k = k.reshape(Bx, S, NUM_HEADS, HEAD_DIM).transpose(0, 2, 1, 3)
    v = v.reshape(Bx, S, NUM_HEADS, HEAD_DIM).transpose(0, 2, 1, 3)
    q = ln(q, p["nq_w"], p["nq_b"], QK_EPS)
    k = ln(k, p["nk_w"], p["nk_b"], QK_EPS)
    s = jnp.einsum("bhqd,bhkd->bhqk", q, k) / jnp.sqrt(HEAD_DIM)
    pr = jax.nn.softmax(s, axis=-1)
    o = jnp.einsum("bhqk,bhkd->bhqd", pr, v).transpose(0, 2, 1, 3).reshape(Bx, S, -1)
    o = o @ p["wo"] + p["bo"]
    attn_e, attn_h = o[:, :St], o[:, St:]
    h = h + g * attn_h
    e = e + eg * attn_e
    nh, ne, gf, egf = norm_zero(p["n2_lin_w"], p["n2_lin_b"], p["n2_ln_w"], p["n2_ln_b"], h, e)
    xf = jnp.concatenate([ne, nh], axis=1)
    f = _gelu_tanh(xf @ p["ff_w1"] + p["ff_b1"]) @ p["ff_w2"] + p["ff_b2"]
    h = h + gf * f[:, St:]
    e = e + egf * f[:, :St]
    return h, e


# ------------------------------- parameter init --------------------------------
def init_params(key):
    # All Linear weights stored pre-transposed as [in, out] so the kernel
    # computes y = x @ W + b (equivalent to torch nn.Linear's x @ W^T + b).
    def nrm(key, shape, s=0.05):
        return (s * jax.random.normal(key, shape)).astype(jnp.float32)

    keys = jax.random.split(key, 20)
    p = {
        "n1_lin_w": nrm(keys[0], (TIME_EMBED_DIM, 6 * DIM)),
        "n1_lin_b": nrm(keys[1], (1, 6 * DIM)),
        "n1_ln_w": 1.0 + nrm(keys[2], (1, DIM)),
        "n1_ln_b": nrm(keys[3], (1, DIM)),
        "wq": nrm(keys[4], (DIM, NUM_HEADS * HEAD_DIM)),
        "wk": nrm(keys[5], (DIM, NUM_HEADS * HEAD_DIM)),
        "wv": nrm(keys[6], (DIM, NUM_HEADS * HEAD_DIM)),
        "nq_w": 1.0 + nrm(keys[7], (1, HEAD_DIM)),
        "nq_b": nrm(keys[8], (1, HEAD_DIM)),
        "nk_w": 1.0 + nrm(keys[9], (1, HEAD_DIM)),
        "nk_b": nrm(keys[10], (1, HEAD_DIM)),
        "wo": nrm(keys[11], (NUM_HEADS * HEAD_DIM, DIM)),
        "bo": nrm(keys[12], (1, DIM)),
        "n2_lin_w": nrm(keys[13], (TIME_EMBED_DIM, 6 * DIM)),
        "n2_lin_b": nrm(keys[14], (1, 6 * DIM)),
        "n2_ln_w": 1.0 + nrm(keys[15], (1, DIM)),
        "n2_ln_b": nrm(keys[16], (1, DIM)),
        "ff_w1": nrm(keys[17], (DIM, FF_INNER)),
        "ff_b1": nrm(keys[18], (1, FF_INNER)),
        "ff_w2": nrm(keys[19], (FF_INNER, DIM)),
        "ff_b2": jnp.zeros((1, DIM), jnp.float32),
    }
    return p


# ------------------------------------ main -------------------------------------
if __name__ == "__main__":
    key = jax.random.PRNGKey(0)
    k_h, k_e, k_t, k_p = jax.random.split(key, 4)

    hidden_states = jax.random.normal(k_h, (BATCH, VID_SEQ, DIM), jnp.float32)
    encoder_hidden_states = jax.random.normal(k_e, (BATCH, TEXT_SEQ, DIM), jnp.float32)
    temb = jax.random.normal(k_t, (BATCH, TIME_EMBED_DIM), jnp.float32)
    params = init_params(k_p)

    h_out, e_out, routing_weights = cogvideox_block(
        hidden_states, encoder_hidden_states, temb, params
    )
    jax.block_until_ready((h_out, e_out))

    # sanity-check against a pure-JAX reference of the same math
    h_ref, e_ref = reference_block(hidden_states, encoder_hidden_states, temb, params)
    max_diff = max(
        float(jnp.max(jnp.abs(h_out - h_ref))),
        float(jnp.max(jnp.abs(e_out - e_ref))),
    )
    assert max_diff < 1e-3, f"mismatch vs reference: {max_diff}"
    assert routing_weights is None

    print("KERNEL_OK")
</pallas_src>

<mosaic_0001>
module attributes {stable_mosaic.version = 11 : i64} {
  func.func @_cogvideox_block_kernel(%arg0: i32, %arg1: memref<1x24x32xf32, #tpu.memory_space<vmem>>, %arg2: memref<2x16xf32, #tpu.memory_space<vmem>>, %arg3: memref<17x384xf32, #tpu.memory_space<vmem>>, %arg4: memref<33x256xf32, #tpu.memory_space<vmem>>, %arg5: memref<170x32xf32, #tpu.memory_space<vmem>>, %arg6: memref<1x16x32xf32, #tpu.memory_space<vmem>>, %arg7: memref<1x8x32xf32, #tpu.memory_space<vmem>>) attributes {dimension_semantics = [#tpu.dimension_semantics<parallel>], iteration_bounds = array<i64: 2>, scalar_prefetch = 0 : i64, scratch_operands = 0 : i64, tpu.core_type = #tpu.core_type<tc>, window_params = [{transform_indices = @transform_0, window_bounds = array<i64: 1, 24, 32>}, {pipeline_mode = #tpu.pipeline_mode<synchronous>, transform_indices = @transform_1, window_bounds = array<i64: 2, 16>}, {pipeline_mode = #tpu.pipeline_mode<synchronous>, transform_indices = @transform_2, window_bounds = array<i64: 17, 384>}, {pipeline_mode = #tpu.pipeline_mode<synchronous>, transform_indices = @transform_3, window_bounds = array<i64: 33, 256>}, {pipeline_mode = #tpu.pipeline_mode<synchronous>, transform_indices = @transform_4, window_bounds = array<i64: 170, 32>}, {transform_indices = @transform_5, window_bounds = array<i64: 1, 16, 32>}, {transform_indices = @transform_6, window_bounds = array<i64: 1, 8, 32>}]} {
    %c0 = arith.constant 0 : index
    %c0_0 = arith.constant 0 : index
    %c0_1 = arith.constant 0 : index
    %0 = vector.load %arg1[%c0, %c0_0, %c0_1] : memref<1x24x32xf32, #tpu.memory_space<vmem>>, vector<1x24x32xf32>
    %1 = vector.shape_cast %0 : vector<1x24x32xf32> to vector<24x32xf32>
    %c162 = arith.constant 162 : index
    %c0_2 = arith.constant 0 : index
    %2 = vector.load %arg5[%c162, %c0_2] : memref<170x32xf32, #tpu.memory_space<vmem>>, vector<1x32xf32>
    %c163 = arith.constant 163 : index
    %c0_3 = arith.constant 0 : index
    %3 = vector.load %arg5[%c163, %c0_3] : memref<170x32xf32, #tpu.memory_space<vmem>>, vector<1x32xf32>
    %c166 = arith.constant 166 : index
    %c0_4 = arith.constant 0 : index
    %4 = vector.load %arg5[%c166, %c0_4] : memref<170x32xf32, #tpu.memory_space<vmem>>, vector<1x32xf32>
    %c167 = arith.constant 167 : index
    %c0_5 = arith.constant 0 : index
    %5 = vector.load %arg5[%c167, %c0_5] : memref<170x32xf32, #tpu.memory_space<vmem>>, vector<1x32xf32>
    %c168 = arith.constant 168 : index
    %c0_6 = arith.constant 0 : index
    %6 = vector.load %arg5[%c168, %c0_6] : memref<170x32xf32, #tpu.memory_space<vmem>>, vector<1x32xf32>
    %c169 = arith.constant 169 : index
    %c0_7 = arith.constant 0 : index
    %7 = vector.load %arg5[%c169, %c0_7] : memref<170x32xf32, #tpu.memory_space<vmem>>, vector<1x32xf32>
    %8 = arith.index_cast %arg0 : i32 to index
    %c0_8 = arith.constant 0 : index
    %9 = vector.load %arg2[%8, %c0_8] : memref<2x16xf32, #tpu.memory_space<vmem>>, vector<1x16xf32>
    %10 = arith.negf %9 : vector<1x16xf32>
    %11 = math.exp %10 : vector<1x16xf32>
    %cst = arith.constant 1.000000e+00 : f32
    %12 = vector.broadcast %cst : f32 to vector<1x16xf32>
    %13 = arith.addf %12, %11 : vector<1x16xf32>
    %14 = arith.divf %12, %13 : vector<1x16xf32>
    %15 = arith.mulf %9, %14 : vector<1x16xf32>
    %c0_9 = arith.constant 0 : index
    %c0_10 = arith.constant 0 : index
    %16 = vector.load %arg3[%c0_9, %c0_10] : memref<17x384xf32, #tpu.memory_space<vmem>>, vector<16x384xf32>
    %cst_11 = arith.constant dense<0.000000e+00> : vector<1x384xf32>
    %17 = tpu.matmul %15, %16, %cst_11 {dimension_numbers = #tpu.dot_dimension_numbers<[1], [0], [0], [1], [0, 0, 1, 1], [], []>} : vector<1x16xf32>, vector<16x384xf32>, vector<1x384xf32> -> vector<1x384xf32>
    %c16 = arith.constant 16 : index
    %c0_12 = arith.constant 0 : index
    %18 = vector.load %arg3[%c16, %c0_12] : memref<17x384xf32, #tpu.memory_space<vmem>>, vector<1x384xf32>
    %19 = arith.addf %17, %18 : vector<1x384xf32>
    %20 = tpu.iota {dimensions = array<i32: 0>} : vector<24x1xi32>
    %c8_i32 = arith.constant 8 : i32
    %21 = vector.broadcast %c8_i32 : i32 to vector<24x1xi32>
    %22 = arith.cmpi slt, %20, %21 : vector<24x1xi32>
    %23 = arith.extui %22 : vector<24x1xi1> to vector<24x1xi32>
    %24 = arith.sitofp %23 : vector<24x1xi32> to vector<24x1xf32>
    %cst_13 = arith.constant 1.000000e+00 : f32
    %25 = vector.broadcast %cst_13 : f32 to vector<24x1xf32>
    %26 = arith.subf %25, %24 : vector<24x1xf32>
    %27 = vector.extract_strided_slice %19 {offsets = [0, 0], sizes = [1, 32], strides = [1, 1]} : vector<1x384xf32> to vector<1x32xf32>
    %28 = vector.broadcast %26 : vector<24x1xf32> to vector<24x32xf32>
    %29 = vector.broadcast %27 : vector<1x32xf32> to vector<24x32xf32>
    %30 = arith.mulf %28, %29 : vector<24x32xf32>
    %31 = vector.extract_strided_slice %19 {offsets = [0, 192], sizes = [1, 32], strides = [1, 1]} : vector<1x384xf32> to vector<1x32xf32>
    %32 = vector.broadcast %24 : vector<24x1xf32> to vector<24x32xf32>
    %33 = vector.broadcast %31 : vector<1x32xf32> to vector<24x32xf32>
    %34 = arith.mulf %32, %33 : vector<24x32xf32>
    %35 = arith.addf %30, %34 : vector<24x32xf32>
    %36 = vector.extract_strided_slice %19 {offsets = [0, 32], sizes = [1, 32], strides = [1, 1]} : vector<1x384xf32> to vector<1x32xf32>
    %37 = vector.broadcast %26 : vector<24x1xf32> to vector<24x32xf32>
    %38 = vector.broadcast %36 : vector<1x32xf32> to vector<24x32xf32>
    %39 = arith.mulf %37, %38 : vector<24x32xf32>
    %40 = vector.extract_strided_slice %19 {offsets = [0, 224], sizes = [1, 32], strides = [1, 1]} : vector<1x384xf32> to vector<1x32xf32>
    %41 = vector.broadcast %24 : vector<24x1xf32> to vector<24x32xf32>
    %42 = vector.broadcast %40 : vector<1x32xf32> to vector<24x32xf32>
    %43 = arith.mulf %41, %42 : vector<24x32xf32>
    %44 = arith.addf %39, %43 : vector<24x32xf32>
    %cst_14 = arith.constant dense<0.000000e+00> : vector<24xf32>
    %45 = vector.multi_reduction <add>, %1, %cst_14 [1] : vector<24x32xf32> to vector<24xf32>
    %46 = vector.shape_cast %45 : vector<24xf32> to vector<24x1xf32>
    %cst_15 = arith.constant 3.200000e+01 : f32
    %47 = vector.broadcast %cst_15 : f32 to vector<24x1xf32>
    %48 = arith.divf %46, %47 : vector<24x1xf32>
    %49 = vector.broadcast %48 : vector<24x1xf32> to vector<24x32xf32>
    %50 = arith.subf %1, %49 : vector<24x32xf32>
    %51 = arith.mulf %50, %50 : vector<24x32xf32>
    %cst_16 = arith.constant dense<0.000000e+00> : vector<24xf32>
    %52 = vector.multi_reduction <add>, %51, %cst_16 [1] : vector<24x32xf32> to vector<24xf32>
    %53 = vector.shape_cast %52 : vector<24xf32> to vector<24x1xf32>
    %cst_17 = arith.constant 3.200000e+01 : f32
    %54 = vector.broadcast %cst_17 : f32 to vector<24x1xf32>
    %55 = arith.divf %53, %54 : vector<24x1xf32>
    %cst_18 = arith.constant 9.99999974E-6 : f32
    %56 = vector.broadcast %cst_18 : f32 to vector<24x1xf32>
    %57 = arith.addf %55, %56 : vector<24x1xf32>
    %58 = math.rsqrt %57 : vector<24x1xf32>
    %59 = vector.broadcast %58 : vector<24x1xf32> to vector<24x32xf32>
    %60 = arith.mulf %50, %59 : vector<24x32xf32>
    %61 = vector.broadcast %2 : vector<1x32xf32> to vector<24x32xf32>
    %62 = arith.mulf %60, %61 : vector<24x32xf32>
    %63 = vector.broadcast %3 : vector<1x32xf32> to vector<24x32xf32>
    %64 = arith.addf %62, %63 : vector<24x32xf32>
    %cst_19 = arith.constant 1.000000e+00 : f32
    %65 = vector.broadcast %cst_19 : f32 to vector<24x32xf32>
    %66 = arith.addf %65, %44 : vector<24x32xf32>
    %67 = arith.mulf %64, %66 : vector<24x32xf32>
    %68 = arith.addf %67, %35 : vector<24x32xf32>
    %c0_20 = arith.constant 0 : index
    %c0_21 = arith.constant 0 : index
    %69 = vector.load %arg4[%c0_20, %c0_21] : memref<33x256xf32, #tpu.memory_space<vmem>>, vector<32x96xf32>
    %cst_22 = arith.constant dense<0.000000e+00> : vector<24x96xf32>
    %70 = tpu.matmul %68, %69, %cst_22 {dimension_numbers = #tpu.dot_dimension_numbers<[1], [0], [0], [1], [0, 0, 1, 1], [], []>} : vector<24x32xf32>, vector<32x96xf32>, vector<24x96xf32> -> vector<24x96xf32>
    %71 = vector.extract_strided_slice %70 {offsets = [0, 0], sizes = [24, 32], strides = [1, 1]} : vector<24x96xf32> to vector<24x32xf32>
    %72 = vector.extract_strided_slice %70 {offsets = [0, 32], sizes = [24, 32], strides = [1, 1]} : vector<24x96xf32> to vector<24x32xf32>
    %73 = vector.extract_strided_slice %70 {offsets = [0, 64], sizes = [24, 32], strides = [1, 1]} : vector<24x96xf32> to vector<24x32xf32>
    %c128 = arith.constant 128 : index
    %c0_23 = arith.constant 0 : index
    %74 = vector.load %arg5[%c128, %c0_23] : memref<170x32xf32, #tpu.memory_space<vmem>>, vector<32x32xf32>
    %cst_24 = arith.constant dense<0.000000e+00> : vector<24x32xf32>
    %75 = tpu.matmul %71, %74, %cst_24 {dimension_numbers = #tpu.dot_dimension_numbers<[1], [0], [0], [1], [0, 0, 1, 1], [], []>} : vector<24x32xf32>, vector<32x32xf32>, vector<24x32xf32> -> vector<24x32xf32>
    %76 = arith.subf %71, %75 : vector<24x32xf32>
    %77 = arith.mulf %76, %76 : vector<24x32xf32>
    %cst_25 = arith.constant dense<0.000000e+00> : vector<24x32xf32>
    %78 = tpu.matmul %77, %74, %cst_25 {dimension_numbers = #tpu.dot_dimension_numbers<[1], [0], [0], [1], [0, 0, 1, 1], [], []>} : vector<24x32xf32>, vector<32x32xf32>, vector<24x32xf32> -> vector<24x32xf32>
    %cst_26 = arith.constant 9.99999997E-7 : f32
    %79 = vector.broadcast %cst_26 : f32 to vector<24x32xf32>
    %80 = arith.addf %78, %79 : vector<24x32xf32>
    %81 = math.rsqrt %80 : vector<24x32xf32>
    %82 = arith.mulf %76, %81 : vector<24x32xf32>
    %83 = vector.broadcast %4 : vector<1x32xf32> to vector<24x32xf32>
    %84 = arith.mulf %82, %83 : vector<24x32xf32>
    %85 = vector.broadcast %5 : vector<1x32xf32> to vector<24x32xf32>
    %86 = arith.addf %84, %85 : vector<24x32xf32>
    %cst_27 = arith.constant dense<0.000000e+00> : vector<24x32xf32>
    %87 = tpu.matmul %72, %74, %cst_27 {dimension_numbers = #tpu.dot_dimension_numbers<[1], [0], [0], [1], [0, 0, 1, 1], [], []>} : vector<24x32xf32>, vector<32x32xf32>, vector<24x32xf32> -> vector<24x32xf32>
    %88 = arith.subf %72, %87 : vector<24x32xf32>
    %89 = arith.mulf %88, %88 : vector<24x32xf32>
    %cst_28 = arith.constant dense<0.000000e+00> : vector<24x32xf32>
    %90 = tpu.matmul %89, %74, %cst_28 {dimension_numbers = #tpu.dot_dimension_numbers<[1], [0], [0], [1], [0, 0, 1, 1], [], []>} : vector<24x32xf32>, vector<32x32xf32>, vector<24x32xf32> -> vector<24x32xf32>
    %cst_29 = arith.constant 9.99999997E-7 : f32
    %91 = vector.broadcast %cst_29 : f32 to vector<24x32xf32>
    %92 = arith.addf %90, %91 : vector<24x32xf32>
    %93 = math.rsqrt %92 : vector<24x32xf32>
    %94 = arith.mulf %88, %93 : vector<24x32xf32>
    %95 = vector.broadcast %6 : vector<1x32xf32> to vector<24x32xf32>
    %96 = arith.mulf %94, %95 : vector<24x32xf32>
    %97 = vector.broadcast %7 : vector<1x32xf32> to vector<24x32xf32>
    %98 = arith.addf %96, %97 : vector<24x32xf32>
    %cst_30 = arith.constant 0.000000e+00 : f32
    %99 = vector.broadcast %cst_30 : f32 to vector<24x32xf32>
    %c160 = arith.constant 160 : index
    %c0_31 = arith.constant 0 : index
    %100 = vector.load %arg5[%c160, %c0_31] : memref<170x32xf32, #tpu.memory_space<vmem>>, vector<1x32xf32>
    %101 = vector.broadcast %100 : vector<1x32xf32> to vector<24x32xf32>
    %102 = arith.mulf %86, %101 : vector<24x32xf32>
    %cst_32 = arith.constant dense<0.000000e+00> : vector<24x24xf32>
    %103 = tpu.matmul %102, %98, %cst_32 {dimension_numbers = #tpu.dot_dimension_numbers<[1], [1], [0], [0], [0, 0, 1, 0], [], []>} : vector<24x32xf32>, vector<24x32xf32>, vector<24x24xf32> -> vector<24x24xf32>
    %cst_33 = arith.constant dense<0xFF800000> : vector<24xf32>
    %104 = vector.multi_reduction <maximumf>, %103, %cst_33 [1] : vector<24x24xf32> to vector<24xf32>
    %105 = vector.shape_cast %104 : vector<24xf32> to vector<24x1xf32>
    %106 = vector.broadcast %105 : vector<24x1xf32> to vector<24x24xf32>
    %107 = arith.subf %103, %106 : vector<24x24xf32>
    %108 = math.exp %107 : vector<24x24xf32>
    %cst_34 = arith.constant dense<0.000000e+00> : vector<24xf32>
    %109 = vector.multi_reduction <add>, %108, %cst_34 [1] : vector<24x24xf32> to vector<24xf32>
    %110 = vector.shape_cast %109 : vector<24xf32> to vector<24x1xf32>
    %111 = tpu.reciprocal %110 {approx = true} : vector<24x1xf32> -> vector<24x1xf32>
    %112 = vector.broadcast %111 : vector<24x1xf32> to vector<24x24xf32>
    %113 = arith.mulf %108, %112 : vector<24x24xf32>
    %114 = vector.broadcast %100 : vector<1x32xf32> to vector<24x32xf32>
    %115 = arith.mulf %73, %114 : vector<24x32xf32>
    %cst_35 = arith.constant dense<0.000000e+00> : vector<24x32xf32>
    %116 = tpu.matmul %113, %115, %cst_35 {dimension_numbers = #tpu.dot_dimension_numbers<[1], [0], [0], [1], [0, 0, 1, 1], [], []>} : vector<24x24xf32>, vector<24x32xf32>, vector<24x32xf32> -> vector<24x32xf32>
    %117 = arith.addf %99, %116 : vector<24x32xf32>
    %c161 = arith.constant 161 : index
    %c0_36 = arith.constant 0 : index
    %118 = vector.load %arg5[%c161, %c0_36] : memref<170x32xf32, #tpu.memory_space<vmem>>, vector<1x32xf32>
    %119 = vector.broadcast %118 : vector<1x32xf32> to vector<24x32xf32>
    %120 = arith.mulf %86, %119 : vector<24x32xf32>
    %cst_37 = arith.constant dense<0.000000e+00> : vector<24x24xf32>
    %121 = tpu.matmul %120, %98, %cst_37 {dimension_numbers = #tpu.dot_dimension_numbers<[1], [1], [0], [0], [0, 0, 1, 0], [], []>} : vector<24x32xf32>, vector<24x32xf32>, vector<24x24xf32> -> vector<24x24xf32>
    %cst_38 = arith.constant dense<0xFF800000> : vector<24xf32>
    %122 = vector.multi_reduction <maximumf>, %121, %cst_38 [1] : vector<24x24xf32> to vector<24xf32>
    %123 = vector.shape_cast %122 : vector<24xf32> to vector<24x1xf32>
    %124 = vector.broadcast %123 : vector<24x1xf32> to vector<24x24xf32>
    %125 = arith.subf %121, %124 : vector<24x24xf32>
    %126 = math.exp %125 : vector<24x24xf32>
    %cst_39 = arith.constant dense<0.000000e+00> : vector<24xf32>
    %127 = vector.multi_reduction <add>, %126, %cst_39 [1] : vector<24x24xf32> to vector<24xf32>
    %128 = vector.shape_cast %127 : vector<24xf32> to vector<24x1xf32>
    %129 = tpu.reciprocal %128 {approx = true} : vector<24x1xf32> -> vector<24x1xf32>
    %130 = vector.broadcast %129 : vector<24x1xf32> to vector<24x24xf32>
    %131 = arith.mulf %126, %130 : vector<24x24xf32>
    %132 = vector.broadcast %118 : vector<1x32xf32> to vector<24x32xf32>
    %133 = arith.mulf %73, %132 : vector<24x32xf32>
    %cst_40 = arith.constant dense<0.000000e+00> : vector<24x32xf32>
    %134 = tpu.matmul %131, %133, %cst_40 {dimension_numbers = #tpu.dot_dimension_numbers<[1], [0], [0], [1], [0, 0, 1, 1], [], []>} : vector<24x24xf32>, vector<24x32xf32>, vector<24x32xf32> -> vector<24x32xf32>
    %135 = arith.addf %117, %134 : vector<24x32xf32>
    %c0_41 = arith.constant 0 : index
    %c96 = arith.constant 96 : index
    %136 = vector.load %arg4[%c0_41, %c96] : memref<33x256xf32, #tpu.memory_space<vmem>>, vector<32x32xf32>
    %cst_42 = arith.constant dense<0.000000e+00> : vector<24x32xf32>
    %137 = tpu.matmul %135, %136, %cst_42 {dimension_numbers = #tpu.dot_dimension_numbers<[1], [0], [0], [1], [0, 0, 1, 1], [], []>} : vector<24x32xf32>, vector<32x32xf32>, vector<24x32xf32> -> vector<24x32xf32>
    %c32 = arith.constant 32 : index
    %c96_43 = arith.constant 96 : index
    %138 = vector.load %arg4[%c32, %c96_43] : memref<33x256xf32, #tpu.memory_space<vmem>>, vector<1x32xf32>
    %139 = vector.broadcast %138 : vector<1x32xf32> to vector<24x32xf32>
    %140 = arith.addf %137, %139 : vector<24x32xf32>
    %141 = vector.extract_strided_slice %19 {offsets = [0, 64], sizes = [1, 32], strides = [1, 1]} : vector<1x384xf32> to vector<1x32xf32>
    %142 = vector.broadcast %26 : vector<24x1xf32> to vector<24x32xf32>
    %143 = vector.broadcast %141 : vector<1x32xf32> to vector<24x32xf32>
    %144 = arith.mulf %142, %143 : vector<24x32xf32>
    %145 = vector.extract_strided_slice %19 {offsets = [0, 256], sizes = [1, 32], strides = [1, 1]} : vector<1x384xf32> to vector<1x32xf32>
    %146 = vector.broadcast %24 : vector<24x1xf32> to vector<24x32xf32>
    %147 = vector.broadcast %145 : vector<1x32xf32> to vector<24x32xf32>
    %148 = arith.mulf %146, %147 : vector<24x32xf32>
    %149 = arith.addf %144, %148 : vector<24x32xf32>
    %150 = arith.mulf %149, %140 : vector<24x32xf32>
    %151 = arith.addf %1, %150 : vector<24x32xf32>
    %c164 = arith.constant 164 : index
    %c0_44 = arith.constant 0 : index
    %152 = vector.load %arg5[%c164, %c0_44] : memref<170x32xf32, #tpu.memory_space<vmem>>, vector<1x32xf32>
    %c165 = arith.constant 165 : index
    %c0_45 = arith.constant 0 : index
    %153 = vector.load %arg5[%c165, %c0_45] : memref<170x32xf32, #tpu.memory_space<vmem>>, vector<1x32xf32>
    %154 = vector.extract_strided_slice %19 {offsets = [0, 96], sizes = [1, 32], strides = [1, 1]} : vector<1x384xf32> to vector<1x32xf32>
    %155 = vector.broadcast %26 : vector<24x1xf32> to vector<24x32xf32>
    %156 = vector.broadcast %154 : vector<1x32xf32> to vector<24x32xf32>
    %157 = arith.mulf %155, %156 : vector<24x32xf32>
    %158 = vector.extract_strided_slice %19 {offsets = [0, 288], sizes = [1, 32], strides = [1, 1]} : vector<1x384xf32> to vector<1x32xf32>
    %159 = vector.broadcast %24 : vector<24x1xf32> to vector<24x32xf32>
    %160 = vector.broadcast %158 : vector<1x32xf32> to vector<24x32xf32>
    %161 = arith.mulf %159, %160 : vector<24x32xf32>
    %162 = arith.addf %157, %161 : vector<24x32xf32>
    %163 = vector.extract_strided_slice %19 {offsets = [0, 128], sizes = [1, 32], strides = [1, 1]} : vector<1x384xf32> to vector<1x32xf32>
    %164 = vector.broadcast %26 : vector<24x1xf32> to vector<24x32xf32>
    %165 = vector.broadcast %163 : vector<1x32xf32> to vector<24x32xf32>
    %166 = arith.mulf %164, %165 : vector<24x32xf32>
    %167 = vector.extract_strided_slice %19 {offsets = [0, 320], sizes = [1, 32], strides = [1, 1]} : vector<1x384xf32> to vector<1x32xf32>
    %168 = vector.broadcast %24 : vector<24x1xf32> to vector<24x32xf32>
    %169 = vector.broadcast %167 : vector<1x32xf32> to vector<24x32xf32>
    %170 = arith.mulf %168, %169 : vector<24x32xf32>
    %171 = arith.addf %166, %170 : vector<24x32xf32>
    %172 = vector.extract_strided_slice %19 {offsets = [0, 160], sizes = [1, 32], strides = [1, 1]} : vector<1x384xf32> to vector<1x32xf32>
    %173 = vector.broadcast %26 : vector<24x1xf32> to vector<24x32xf32>
    %174 = vector.broadcast %172 : vector<1x32xf32> to vector<24x32xf32>
    %175 = arith.mulf %173, %174 : vector<24x32xf32>
    %176 = vector.extract_strided_slice %19 {offsets = [0, 352], sizes = [1, 32], strides = [1, 1]} : vector<1x384xf32> to vector<1x32xf32>
    %177 = vector.broadcast %24 : vector<24x1xf32> to vector<24x32xf32>
    %178 = vector.broadcast %176 : vector<1x32xf32> to vector<24x32xf32>
    %179 = arith.mulf %177, %178 : vector<24x32xf32>
    %180 = arith.addf %175, %179 : vector<24x32xf32>
    %cst_46 = arith.constant dense<0.000000e+00> : vector<24xf32>
    %181 = vector.multi_reduction <add>, %151, %cst_46 [1] : vector<24x32xf32> to vector<24xf32>
    %182 = vector.shape_cast %181 : vector<24xf32> to vector<24x1xf32>
    %cst_47 = arith.constant 3.200000e+01 : f32
    %183 = vector.broadcast %cst_47 : f32 to vector<24x1xf32>
    %184 = arith.divf %182, %183 : vector<24x1xf32>
    %185 = vector.broadcast %184 : vector<24x1xf32> to vector<24x32xf32>
    %186 = arith.subf %151, %185 : vector<24x32xf32>
    %187 = arith.mulf %186, %186 : vector<24x32xf32>
    %cst_48 = arith.constant dense<0.000000e+00> : vector<24xf32>
    %188 = vector.multi_reduction <add>, %187, %cst_48 [1] : vector<24x32xf32> to vector<24xf32>
    %189 = vector.shape_cast %188 : vector<24xf32> to vector<24x1xf32>
    %cst_49 = arith.constant 3.200000e+01 : f32
    %190 = vector.broadcast %cst_49 : f32 to vector<24x1xf32>
    %191 = arith.divf %189, %190 : vector<24x1xf32>
    %cst_50 = arith.constant 9.99999974E-6 : f32
    %192 = vector.broadcast %cst_50 : f32 to vector<24x1xf32>
    %193 = arith.addf %191, %192 : vector<24x1xf32>
    %194 = math.rsqrt %193 : vector<24x1xf32>
    %195 = vector.broadcast %194 : vector<24x1xf32> to vector<24x32xf32>
    %196 = arith.mulf %186, %195 : vector<24x32xf32>
    %197 = vector.broadcast %152 : vector<1x32xf32> to vector<24x32xf32>
    %198 = arith.mulf %196, %197 : vector<24x32xf32>
    %199 = vector.broadcast %153 : vector<1x32xf32> to vector<24x32xf32>
    %200 = arith.addf %198, %199 : vector<24x32xf32>
    %cst_51 = arith.constant 1.000000e+00 : f32
    %201 = vector.broadcast %cst_51 : f32 to vector<24x32xf32>
    %202 = arith.addf %201, %171 : vector<24x32xf32>
    %203 = arith.mulf %200, %202 : vector<24x32xf32>
    %204 = arith.addf %203, %162 : vector<24x32xf32>
    %c0_52 = arith.constant 0 : index
    %c128_53 = arith.constant 128 : index
    %205 = vector.load %arg4[%c0_52, %c128_53] : memref<33x256xf32, #tpu.memory_space<vmem>>, vector<32x128xf32>
    %cst_54 = arith.constant dense<0.000000e+00> : vector<24x128xf32>
    %206 = tpu.matmul %204, %205, %cst_54 {dimension_numbers = #tpu.dot_dimension_numbers<[1], [0], [0], [1], [0, 0, 1, 1], [], []>} : vector<24x32xf32>, vector<32x128xf32>, vector<24x128xf32> -> vector<24x128xf32>
    %c32_55 = arith.constant 32 : index
    %c128_56 = arith.constant 128 : index
    %207 = vector.load %arg4[%c32_55, %c128_56] : memref<33x256xf32, #tpu.memory_space<vmem>>, vector<1x128xf32>
    %208 = vector.broadcast %207 : vector<1x128xf32> to vector<24x128xf32>
    %209 = arith.addf %206, %208 : vector<24x128xf32>
    %cst_57 = arith.constant 5.000000e-01 : f32
    %210 = vector.broadcast %cst_57 : f32 to vector<24x128xf32>
    %211 = arith.mulf %210, %209 : vector<24x128xf32>
    %cst_58 = arith.constant 4.471500e-02 : f32
    %212 = vector.broadcast %cst_58 : f32 to vector<24x128xf32>
    %213 = arith.mulf %212, %209 : vector<24x128xf32>
    %214 = arith.mulf %213, %209 : vector<24x128xf32>
    %215 = arith.mulf %214, %209 : vector<24x128xf32>
    %216 = arith.addf %209, %215 : vector<24x128xf32>
    %cst_59 = arith.constant 0.797884583 : f32
    %217 = vector.broadcast %cst_59 : f32 to vector<24x128xf32>
    %218 = arith.mulf %217, %216 : vector<24x128xf32>
    %219 = math.tanh %218 : vector<24x128xf32>
    %cst_60 = arith.constant 1.000000e+00 : f32
    %220 = vector.broadcast %cst_60 : f32 to vector<24x128xf32>
    %221 = arith.addf %220, %219 : vector<24x128xf32>
    %222 = arith.mulf %211, %221 : vector<24x128xf32>
    %c0_61 = arith.constant 0 : index
    %c0_62 = arith.constant 0 : index
    %223 = vector.load %arg5[%c0_61, %c0_62] : memref<170x32xf32, #tpu.memory_space<vmem>>, vector<128x32xf32>
    %cst_63 = arith.constant dense<0.000000e+00> : vector<24x32xf32>
    %224 = tpu.matmul %222, %223, %cst_63 {dimension_numbers = #tpu.dot_dimension_numbers<[1], [0], [0], [1], [0, 0, 1, 1], [], []>} : vector<24x128xf32>, vector<128x32xf32>, vector<24x32xf32> -> vector<24x32xf32>
    %c32_64 = arith.constant 32 : index
    %c0_65 = arith.constant 0 : index
    %225 = vector.load %arg4[%c32_64, %c0_65] : memref<33x256xf32, #tpu.memory_space<vmem>>, vector<1x32xf32>
    %226 = vector.broadcast %225 : vector<1x32xf32> to vector<24x32xf32>
    %227 = arith.addf %224, %226 : vector<24x32xf32>
    %228 = arith.mulf %180, %227 : vector<24x32xf32>
    %229 = arith.addf %151, %228 : vector<24x32xf32>
    %230 = vector.extract_strided_slice %229 {offsets = [0, 0], sizes = [8, 32], strides = [1, 1]} : vector<24x32xf32> to vector<8x32xf32>
    %c0_66 = arith.constant 0 : index
    %c0_67 = arith.constant 0 : index
    %c0_68 = arith.constant 0 : index
    %231 = vector.load %arg7[%c0_66, %c0_67, %c0_68] : memref<1x8x32xf32, #tpu.memory_space<vmem>>, vector<1x8x32xf32>
    %232 = vector.shape_cast %231 : vector<1x8x32xf32> to vector<8x32xf32>
    %233 = vector.shape_cast %230 : vector<8x32xf32> to vector<1x8x32xf32>
    tpu.vector_store %arg7[%c0_66, %c0_67, %c0_68], %233 {strides = array<i32>} : memref<1x8x32xf32, #tpu.memory_space<vmem>>, vector<1x8x32xf32>,
    %234 = vector.extract_strided_slice %229 {offsets = [8, 0], sizes = [16, 32], strides = [1, 1]} : vector<24x32xf32> to vector<16x32xf32>
    %c0_69 = arith.constant 0 : index
    %c0_70 = arith.constant 0 : index
    %c0_71 = arith.constant 0 : index
    %235 = vector.load %arg6[%c0_69, %c0_70, %c0_71] : memref<1x16x32xf32, #tpu.memory_space<vmem>>, vector<1x16x32xf32>
    %236 = vector.shape_cast %235 : vector<1x16x32xf32> to vector<16x32xf32>
    %237 = vector.shape_cast %234 : vector<16x32xf32> to vector<1x16x32xf32>
    tpu.vector_store %arg6[%c0_69, %c0_70, %c0_71], %237 {strides = array<i32>} : memref<1x16x32xf32, #tpu.memory_space<vmem>>, vector<1x16x32xf32>,
    return
  }
  func.func @transform_0(%arg0: i32) -> (i32, i32, i32) {
    %c0_i32 = arith.constant 0 : i32
    %c0_i32_0 = arith.constant 0 : i32
    %c0_i32_1 = arith.constant 0 : i32
    return %arg0, %c0_i32, %c0_i32_0 : i32, i32, i32
  }
  func.func @transform_1(%arg0: i32) -> (i32, i32) {
    %c0_i32 = arith.constant 0 : i32
    %c0_i32_0 = arith.constant 0 : i32
    %c0_i32_1 = arith.constant 0 : i32
    return %c0_i32, %c0_i32_0 : i32, i32
  }
  func.func @transform_2(%arg0: i32) -> (i32, i32) {
    %c0_i32 = arith.constant 0 : i32
    %c0_i32_0 = arith.constant 0 : i32
    %c0_i32_1 = arith.constant 0 : i32
    return %c0_i32, %c0_i32_0 : i32, i32
  }
  func.func @transform_3(%arg0: i32) -> (i32, i32) {
    %c0_i32 = arith.constant 0 : i32
    %c0_i32_0 = arith.constant 0 : i32
    %c0_i32_1 = arith.constant 0 : i32
    return %c0_i32, %c0_i32_0 : i32, i32
  }
  func.func @transform_4(%arg0: i32) -> (i32, i32) {
    %c0_i32 = arith.constant 0 : i32
    %c0_i32_0 = arith.constant 0 : i32
    %c0_i32_1 = arith.constant 0 : i32
    return %c0_i32, %c0_i32_0 : i32, i32
  }
  func.func @transform_5(%arg0: i32) -> (i32, i32, i32) {
    %c0_i32 = arith.constant 0 : i32
    %c0_i32_0 = arith.constant 0 : i32
    %c0_i32_1 = arith.constant 0 : i32
    return %arg0, %c0_i32, %c0_i32_0 : i32, i32, i32
  }
  func.func @transform_6(%arg0: i32) -> (i32, i32, i32) {
    %c0_i32 = arith.constant 0 : i32
    %c0_i32_0 = arith.constant 0 : i32
    %c0_i32_1 = arith.constant 0 : i32
    return %arg0, %c0_i32, %c0_i32_0 : i32, i32, i32
  }
}

</mosaic_0001>

<llo_original>
// kernel: tpu_custom_call.1
$region0: #{tpu_custom_call.1}
  #allocation0 [shape = 'u32[]', space=smem, size = 0x4, offset = 0x4, fixed_abs, tag = 'smem constant byte address 0x4 - core index']
  #allocation1 [shape = 'u32[72,128]{1,0:T(1,128)}', space=vmem, size = 0x9000, scoped, tag = 'internal scratch']
  %s0 = inlined_call_operand.vmem [shape: f32[2,24,32], index: 0, kind: input, shape index: {}]
  %s1 = inlined_call_operand.vmem [shape: f32[2,16], index: 1, kind: input, shape index: {}]
  %s2 = inlined_call_operand.vmem [shape: f32[17,384], index: 2, kind: input, shape index: {}]
  %s3 = inlined_call_operand.vmem [shape: f32[33,256], index: 3, kind: input, shape index: {}]
  %s4 = inlined_call_operand.vmem [shape: f32[170,32], index: 4, kind: input, shape index: {}]
  %s5 = inlined_call_operand.hbm [shape: f32[2,16,32], index: 5, kind: output, shape index: {0}]
  %s6 = inlined_call_operand.hbm [shape: f32[2,8,32], index: 6, kind: output, shape index: {1}]
  %7 = xla_tuple %s5, %s6
  %s8 = sld [smem:[#allocation0]]
  $region61: #{tpu_custom_call.1} parent=0
    _
  %s10 = ssub.s32 1, %s8
  %s11 = scalar_select 0, %s10, %s8
  $region1: #{tpu_custom_call.1} parent=0
    #allocation2 [shape = 'u8[16384]{0}', space=vmem, size = 0x4000, scoped, tag = 'output window, operand 0']
    #allocation3 [shape = 's32[2]{0}', space=sflag, size = 0x8, scoped, tag = 'scoped memory for tpu_custom_call.1']
    #allocation4 [shape = 'u8[8192]{0}', space=vmem, size = 0x2000, scoped, tag = 'output window, operand 1']
    #allocation5 [shape = 's32[2]{0}', space=sflag, size = 0x8, scoped, tag = 'scoped memory for tpu_custom_call.1']
    %12 = vsyncpa [#allocation3], 0
    %s13 = scalar_lea.sflag [#allocation3], 1
    %14 = vsyncpa %s13, 0
    %15 = vsyncpa [#allocation5], 0
    %s16 = scalar_lea.sflag [#allocation5], 1
    %17 = vsyncpa %s16, 0
    loop: start=0, step=1, limit=4
    $region2: #{tpu_custom_call.1} parent=1 // loop_pre_header
      _
    $region3: #{tpu_custom_call.1} parent=1 // loop_header
      %s19 = sphi 0, %s23
      %p20 = scmp.ge.s32.totalorder %s19, 4
      %s29 = sphi 0, %s31
      %s32 = sphi 0, %s29
      %s33 = sphi 0, %s32
      %s49 = sphi 0, %s33
      %s53 = sphi 0, %s53
      %s55 = sphi 0, %s53
      %s56 = sphi 0, %s55
      %s70 = sphi 0, %s56
      %s74 = sphi 0, %s74
      %s76 = sphi 0, %s74
      %s77 = sphi 0, %s76
      %s91 = sphi 0, %s77
      %s95 = sphi 0, %s95
      %s97 = sphi 0, %s95
      %s98 = sphi 0, %s97
      %s112 = sphi 0, %s98
      %s116 = sphi 0, %s116
      %s118 = sphi 0, %s116
      %s119 = sphi 0, %s118
      %s133 = sphi 0, %s119
      %s139 = sphi 0, %s141
      %s142 = sphi 0, %s139
      %s143 = sphi 0, %s142
      %s159 = sphi 0, %s143
      %s165 = sphi 0, %s167
      %s168 = sphi 0, %s165
      %s169 = sphi 0, %s168
      %s185 = sphi 0, %s169
    $region4: #{tpu_custom_call.1} parent=1 // loop_header_branch
      %22 = sbr.rel (%p20) target = $region8
    $region5: #{tpu_custom_call.1} parent=1 // loop_body
      %s24 = ssub.s32 %s19, 1
      %s25 = ssub.s32 %s19, 2
      %s26 = sadd.s32 %s19, 1
      %s27 = ssub.s32 %s19, %s26
      %p28 = scmp.eq.s32.totalorder %s27, 0
      %s30 = sadd.s32 %s29, 1
      %s31 = scalar_select %p28, %s29, %s30
      %p34 = pneg %p28
      %p35 = scmp.eq.s32.totalorder %s19, 1
      %p36 = por %p34, %p35
      %p37 = scmp.ne.s32.totalorder %s29, %s32
      %p38 = scmp.eq.s32.totalorder %s19, 0
      %p39 = por %p37, %p38
      %p40 = scmp.ne.s32.totalorder %s29, %s32
      %p41 = scmp.eq.s32.totalorder %s24, 1
      %p42 = por %p40, %p41
      %p43 = scmp.ne.s32.totalorder %s32, %s33
      %p44 = scmp.eq.s32.totalorder %s24, 0
      %p45 = por %p43, %p44
      %p46 = scmp.ne.s32.totalorder %s32, %s33
      %p47 = scmp.eq.s32.totalorder %s25, 1
      %p48 = por %p46, %p47
      %p50 = scmp.ne.s32.totalorder %s33, %s49
      %p51 = scmp.eq.s32.totalorder %s25, 0
      %p52 = por %p50, %p51
      %s54 = sadd.s32 %s53, 1
      %p57 = scmp.eq.s32.totalorder %s19, 1
      %p58 = scmp.ne.s32.totalorder %s53, %s55
      %p59 = scmp.eq.s32.totalorder %s19, 0
      %p60 = por %p58, %p59
      %p61 = scmp.ne.s32.totalorder %s53, %s55
      %p62 = scmp.eq.s32.totalorder %s24, 1
      %p63 = por %p61, %p62
      %p64 = scmp.ne.s32.totalorder %s55, %s56
      %p65 = scmp.eq.s32.totalorder %s24, 0
      %p66 = por %p64, %p65
      %p67 = scmp.ne.s32.totalorder %s55, %s56
      %p68 = scmp.eq.s32.totalorder %s25, 1
      %p69 = por %p67, %p68
      %p71 = scmp.ne.s32.totalorder %s56, %s70
      %p72 = scmp.eq.s32.totalorder %s25, 0
      %p73 = por %p71, %p72
      %s75 = sadd.s32 %s74, 1
      %p78 = scmp.eq.s32.totalorder %s19, 1
      %p79 = scmp.ne.s32.totalorder %s74, %s76
      %p80 = scmp.eq.s32.totalorder %s19, 0
      %p81 = por %p79, %p80
      %p82 = scmp.ne.s32.totalorder %s74, %s76
      %p83 = scmp.eq.s32.totalorder %s24, 1
      %p84 = por %p82, %p83
      %p85 = scmp.ne.s32.totalorder %s76, %s77
      %p86 = scmp.eq.s32.totalorder %s24, 0
      %p87 = por %p85, %p86
      %p88 = scmp.ne.s32.totalorder %s76, %s77
      %p89 = scmp.eq.s32.totalorder %s25, 1
      %p90 = por %p88, %p89
      %p92 = scmp.ne.s32.totalorder %s77, %s91
      %p93 = scmp.eq.s32.totalorder %s25, 0
      %p94 = por %p92, %p93
      %s96 = sadd.s32 %s95, 1
      %p99 = scmp.eq.s32.totalorder %s19, 1
      %p100 = scmp.ne.s32.totalorder %s95, %s97
      %p101 = scmp.eq.s32.totalorder %s19, 0
      %p102 = por %p100, %p101
      %p103 = scmp.ne.s32.totalorder %s95, %s97
      %p104 = scmp.eq.s32.totalorder %s24, 1
      %p105 = por %p103, %p104
      %p106 = scmp.ne.s32.totalorder %s97, %s98
      %p107 = scmp.eq.s32.totalorder %s24, 0
      %p108 = por %p106, %p107
      %p109 = scmp.ne.s32.totalorder %s97, %s98
      %p110 = scmp.eq.s32.totalorder %s25, 1
      %p111 = por %p109, %p110
      %p113 = scmp.ne.s32.totalorder %s98, %s112
      %p114 = scmp.eq.s32.totalorder %s25, 0
      %p115 = por %p113, %p114
      %s117 = sadd.s32 %s116, 1
      %p120 = scmp.eq.s32.totalorder %s19, 1
      %p121 = scmp.ne.s32.totalorder %s116, %s118
      %p122 = scmp.eq.s32.totalorder %s19, 0
      %p123 = por %p121, %p122
      %p124 = scmp.ne.s32.totalorder %s116, %s118
      %p125 = scmp.eq.s32.totalorder %s24, 1
      %p126 = por %p124, %p125
      %p127 = scmp.ne.s32.totalorder %s118, %s119
      %p128 = scmp.eq.s32.totalorder %s24, 0
      %p129 = por %p127, %p128
      %p130 = scmp.ne.s32.totalorder %s118, %s119
      %p131 = scmp.eq.s32.totalorder %s25, 1
      %p132 = por %p130, %p131
      %p134 = scmp.ne.s32.totalorder %s119, %s133
      %p135 = scmp.eq.s32.totalorder %s25, 0
      %p136 = por %p134, %p135
      %s137 = ssub.s32 %s19, %s26
      %p138 = scmp.eq.s32.totalorder %s137, 0
      %s140 = sadd.s32 %s139, 1
      %s141 = scalar_select %p138, %s139, %s140
      %p144 = pneg %p138
      %p145 = scmp.eq.s32.totalorder %s19, 1
      %p146 = por %p144, %p145
      %p147 = scmp.ne.s32.totalorder %s139, %s142
      %p148 = scmp.eq.s32.totalorder %s19, 0
      %p149 = por %p147, %p148
      %p150 = scmp.ne.s32.totalorder %s139, %s142
      %p151 = scmp.eq.s32.totalorder %s24, 1
      %p152 = por %p150, %p151
      %p153 = scmp.ne.s32.totalorder %s142, %s143
      %p154 = scmp.eq.s32.totalorder %s24, 0
      %p155 = por %p153, %p154
      %p156 = scmp.ne.s32.totalorder %s142, %s143
      %p157 = scmp.eq.s32.totalorder %s25, 1
      %p158 = por %p156, %p157
      %p160 = scmp.ne.s32.totalorder %s143, %s159
      %p161 = scmp.eq.s32.totalorder %s25, 0
      %p162 = por %p160, %p161
      %s163 = ssub.s32 %s19, %s26
      %p164 = scmp.eq.s32.totalorder %s163, 0
      %s166 = sadd.s32 %s165, 1
      %s167 = scalar_select %p164, %s165, %s166
      %p170 = pneg %p164
      %p171 = scmp.eq.s32.totalorder %s19, 1
      %p172 = por %p170, %p171
      %p173 = scmp.ne.s32.totalorder %s165, %s168
      %p174 = scmp.eq.s32.totalorder %s19, 0
      %p175 = por %p173, %p174
      %p176 = scmp.ne.s32.totalorder %s165, %s168
      %p177 = scmp.eq.s32.totalorder %s24, 1
      %p178 = por %p176, %p177
      %p179 = scmp.ne.s32.totalorder %s168, %s169
      %p180 = scmp.eq.s32.totalorder %s24, 0
      %p181 = por %p179, %p180
      %p182 = scmp.ne.s32.totalorder %s168, %s169
      %p183 = scmp.eq.s32.totalorder %s25, 1
      %p184 = por %p182, %p183
      %p186 = scmp.ne.s32.totalorder %s169, %s185
      %p187 = scmp.eq.s32.totalorder %s25, 0
      %p188 = por %p186, %p187
      %p189 = scmp.le.s32.totalorder 1, %s19
      %p190 = scmp.lt.s32.totalorder %s19, 3
      %p191 = pnand %p189, %p190
      %p192 = pneg %p191
      // Predicated region
      $region9: #{tpu_custom_call.1} parent=5 // pred_check
        _
      $region10: #{tpu_custom_call.1} parent=5 // pred_check_branch
        %194 = sbr.rel (%p191) target = $region12
      $region11: #{tpu_custom_call.1} parent=5 // pred_region
        %s195 = ssub.s32 %s19, 1
        // Predicated region
        $region13: #{tpu_custom_call.1} parent=11 // pred_check
          %p196 = pneg %p66
        $region14: #{tpu_custom_call.1} parent=11 // pred_check_branch
          %198 = sbr.rel (%p196) target = $region16
        $region15: #{tpu_custom_call.1} parent=11 // pred_region
          _
        $region16: #{tpu_custom_call.1} parent=11 // pred_fallthru
          _
        // Predicated region
        $region17: #{tpu_custom_call.1} parent=11 // pred_check
          %p199 = pneg %p87
        $region18: #{tpu_custom_call.1} parent=11 // pred_check_branch
          %201 = sbr.rel (%p199) target = $region20
        $region19: #{tpu_custom_call.1} parent=11 // pred_region
          _
        $region20: #{tpu_custom_call.1} parent=11 // pred_fallthru
          _
        // Predicated region
        $region21: #{tpu_custom_call.1} parent=11 // pred_check
          %p202 = pneg %p108
        $region22: #{tpu_custom_call.1} parent=11 // pred_check_branch
          %204 = sbr.rel (%p202) target = $region24
        $region23: #{tpu_custom_call.1} parent=11 // pred_region
          _
        $region24: #{tpu_custom_call.1} parent=11 // pred_fallthru
          _
        // Predicated region
        $region25: #{tpu_custom_call.1} parent=11 // pred_check
          %p205 = pneg %p129
        $region26: #{tpu_custom_call.1} parent=11 // pred_check_branch
          %207 = sbr.rel (%p205) target = $region28
        $region27: #{tpu_custom_call.1} parent=11 // pred_region
          _
        $region28: #{tpu_custom_call.1} parent=11 // pred_fallthru
          _
      $region12: #{tpu_custom_call.1} parent=5 // pred_fallthru
        _
      %p208 = scmp.lt.s32.totalorder %s19, 2
      // Predicated region
      $region29: #{tpu_custom_call.1} parent=5 // pred_check
        %p209 = pneg %p208
      $region30: #{tpu_custom_call.1} parent=5 // pred_check_branch
        %211 = sbr.rel (%p209) target = $region32
      $region31: #{tpu_custom_call.1} parent=5 // pred_region
        // Predicated region
        $region33: #{tpu_custom_call.1} parent=31 // pred_check
          %p212 = pneg %p39
        $region34: #{tpu_custom_call.1} parent=31 // pred_check_branch
          %214 = sbr.rel (%p212) target = $region36
        $region35: #{tpu_custom_call.1} parent=31 // pred_region
          %p215 = scmp.lt.s32.totalorder %s19, 1
          %s216 = scalar_select %p215, %s19, 1
          %s217 = smul.addr %s216, 3
          %s218 = smul.addr %s217, 8
          %s219 = scalar_lea.vmem %s0, %s218
        $region36: #{tpu_custom_call.1} parent=31 // pred_fallthru
          _
      $region32: #{tpu_custom_call.1} parent=5 // pred_fallthru
        _
      %p220 = scmp.le.s32.totalorder 1, %s19
      %p221 = scmp.lt.s32.totalorder %s19, 3
      %p222 = pnand %p220, %p221
      %p223 = pneg %p222
      // Predicated region
      $region37: #{tpu_custom_call.1} parent=5 // pred_check
        _
      $region38: #{tpu_custom_call.1} parent=5 // pred_check_branch
        %225 = sbr.rel (%p222) target = $region40
      $region39: #{tpu_custom_call.1} parent=5 // pred_region
        %s226 = ssub.s32 %s19, 1
        %p227 = scmp.lt.s32.totalorder %s24, 1
        %s228 = scalar_select %p227, %s24, 1
        %s229 = smul.addr %s228, 3
        %s230 = smul.addr %s229, 8
        %s231 = scalar_lea.vmem %s0, %s230
        %p232 = pneg %p45
        %p233 = pneg %p42
        %p234 = pneg %p66
        %p235 = pneg %p63
        %p236 = pneg %p87
        %p237 = pneg %p84
        %p238 = pneg %p108
        %p239 = pneg %p105
        %p240 = pneg %p129
        %p241 = pneg %p126
        %p242 = pneg %p155
        %p243 = pneg %p152
        %s244 = sand.u32 %s142, 1
        %s245 = scalar_lea.sflag [#allocation3], %s244
        %s246 = sand.u32 %s142, 1
        %s247 = smul.addr %s246, 16
        %s248 = scalar_lea.vmem [#allocation2], %s247
        %p249 = pneg %p181
        %p250 = pneg %p178
        %s251 = sand.u32 %s168, 1
        %s252 = scalar_lea.sflag [#allocation5], %s251
        %s253 = sand.u32 %s168, 1
        %s254 = smul.addr %s253, 8
        %s255 = scalar_lea.vmem [#allocation4], %s254
        %p256 = scmp.lt.s32.totalorder %s24, 1
        %s257 = scalar_select %p256, %s24, 1
        %s258 = smul.addr %s257, 3
        %s259 = smul.addr %s258, 8
        %s260 = scalar_lea.vmem %s0, %s259
        %v261 = vld [vmem:[%s260] sm:$0xff]
        %v262 = vld [vmem:[%s260 + $0x8] sm:$0xff]
        %v263 = vld [vmem:[%s260 + $0x10] sm:$0xff]
        %v264 = vld [vmem:[%s4 + $0xa2] sm:$0x1]
        %v265 = vld [vmem:[%s4 + $0xa3] sm:$0x1]
        %v266 = vld [vmem:[%s4 + $0xa6] sm:$0x1]
        %v267 = vld [vmem:[%s4 + $0xa7] sm:$0x1]
        %v268 = vld [vmem:[%s4 + $0xa8] sm:$0x1]
        %v269 = vld [vmem:[%s4 + $0xa9] sm:$0x1]
        %s270 = scalar_lea.vmem %s1, %s24
        %v271 = vld [vmem:[%s270] sm:$0x1]
        %v272 = vxor.u32 %v271, 2147483648
        %v273 = vmul.f32 %v272, 1.442695
        %v274 = vpow.pop %v273
        %v275 = vadd.f32 %v274, 1.0
        %v276 = vrcp.pop %v275
        %v277 = vmul.f32 %v275, %v276
        %v278 = vsub.f32 1.0, %v277
        %v279 = vmul.f32 %v276, %v278
        %v280 = vadd.f32 %v276, %v279
        %vm281 = vweird.f32 %v275
        %vm282 = vweird.f32 %v276
        %vm283 = vmor %vm281, %vm282
        %v284 = vsel %vm283, %v276, %v280
        %v285 = vand.u32 2147483647, %v275
        %vm286 = vcmp.eq.f32.partialorder %v285, 8.507059e+37
        %v287 = vand.u32 %v275, 2147483648
        %v288 = vor.u32 1.1754944e-38, %v287
        %v289 = vsel %vm286, %v288, %v284
        %v290 = vmul.f32 1.0, %v289
        %v291 = vmul.f32 %v271, %v290
        %v292 = vld [vmem:[%s2] sm:$0xff]
        %v293 = vld [vmem:[%s2 + $0x8] sm:$0xff]
        %v294 = vld [vmem:[%s2 + $0x10] sm:$0xff]
        %v295 = vld [vmem:[%s2 + $0x18] sm:$0xff]
        %v296 = vld [vmem:[%s2 + $0x20] sm:$0xff]
        %v297 = vld [vmem:[%s2 + $0x28] sm:$0xff]
        %s298 = scalar_lea.vmem %s2, 48
        %v299 = vld [vmem:[%s298] ss:$8 sm:$0x7]
        %v301 = vperm.slane %v299, 0
        %v302 = vperm.slane %v299, 1
        %v303 = vperm.slane %v299, 2
        %vm307 = vcmask 130048
        %v309 = vsel %vm307, %v291, 0
        %311 = vmatpush.msra.mxu0 0.0
        %312 = vmatpush.msra.mxu0 0.0
        %313 = vmatpush.msra.mxu0 0.0
        %314 = vmatpush.msra.mxu0 0.0
        %315 = vmatpush.msra.mxu0 0.0
        %316 = vmatpush.msra.mxu0 0.0
        %317 = vmatpush.msra.mxu0 0.0
        %318 = vmatpush.msra.mxu0 0.0
        %319 = vmatpush.msra.mxu0 0.0
        %320 = vmatpush.msra.mxu0 0.0
        %321 = vmatpush.msra.mxu0 0.0
        %322 = vmatpush.msra.mxu0 0.0
        %323 = vmatpush.msra.mxu0 0.0
        %324 = vmatpush.msra.mxu0 0.0
        %325 = vmatpush.msra.mxu0 %v295
        %326 = vmatpush.msra.mxu0 %v292
        %327 = vmatmul.f32.gmra.mxu0 %v309
        %v328 = vpop.f32.mrf.mxu0
        %v329 = vadd.f32 %v301, %v328
        %330 = vdwg.mxu0
        %331 = vmatpush.msra.mxu0 0.0
        %332 = vmatpush.msra.mxu0 0.0
        %333 = vmatpush.msra.mxu0 0.0
        %334 = vmatpush.msra.mxu0 0.0
        %335 = vmatpush.msra.mxu0 0.0
        %336 = vmatpush.msra.mxu0 0.0
        %337 = vmatpush.msra.mxu0 0.0
        %338 = vmatpush.msra.mxu0 0.0
        %339 = vmatpush.msra.mxu0 0.0
        %340 = vmatpush.msra.mxu0 0.0
        %341 = vmatpush.msra.mxu0 0.0
        %342 = vmatpush.msra.mxu0 0.0
        %343 = vmatpush.msra.mxu0 0.0
        %344 = vmatpush.msra.mxu0 0.0
        %345 = vmatpush.msra.mxu0 %v296
        %346 = vmatpush.msra.mxu0 %v293
        %347 = vmatmul.f32.gmra.mxu0 %v309
        %v348 = vpop.f32.mrf.mxu0
        %v349 = vadd.f32 %v302, %v348
        %350 = vdwg.mxu0
        %351 = vmatpush.msra.mxu0 0.0
        %352 = vmatpush.msra.mxu0 0.0
        %353 = vmatpush.msra.mxu0 0.0
        %354 = vmatpush.msra.mxu0 0.0
        %355 = vmatpush.msra.mxu0 0.0
        %356 = vmatpush.msra.mxu0 0.0
        %357 = vmatpush.msra.mxu0 0.0
        %358 = vmatpush.msra.mxu0 0.0
        %359 = vmatpush.msra.mxu0 0.0
        %360 = vmatpush.msra.mxu0 0.0
        %361 = vmatpush.msra.mxu0 0.0
        %362 = vmatpush.msra.mxu0 0.0
        %363 = vmatpush.msra.mxu0 0.0
        %364 = vmatpush.msra.mxu0 0.0
        %365 = vmatpush.msra.mxu0 %v297
        %366 = vmatpush.msra.mxu0 %v294
        %367 = vmatmul.f32.gmra.mxu0 %v309
        %v368 = vpop.f32.mrf.mxu0
        %v369 = vadd.f32 %v303, %v368
        %370 = vdwg.mxu0
        %v371 = vlaneseq
        %v372 = vshrl.u32 %v371, 7
        %v373 = vadd.s32 %v372, 8
        %v374 = vadd.s32 %v372, 16
        %vm375 = vcmp.lt.s32.totalorder %v372, 8
        %vm376 = vcmp.lt.s32.totalorder %v373, 8
        %vm377 = vcmp.lt.s32.totalorder %v374, 8
        %v378 = vsel %vm375, 1, 0
        %v379 = vsel %vm376, 1, 0
        %v380 = vsel %vm377, 1, 0
        %v381 = vcvt.s32.f32 %v378
        %v382 = vcvt.s32.f32 %v379
        %v383 = vcvt.s32.f32 %v380
        %v384 = vsub.f32 1.0, %v381
        %v385 = vsub.f32 1.0, %v382
        %v386 = vsub.f32 1.0, %v383
        %v387 = vperm.slane %v329, 0
        %v388 = vmul.f32 %v384, %v387
        %v389 = vmul.f32 %v385, %v387
        %v390 = vmul.f32 %v386, %v387
        %v391 = vperm.slane %v349, 0
        %v392 = vmul.f32 %v381, %v391
        %v393 = vmul.f32 %v382, %v391
        %v394 = vmul.f32 %v383, %v391
        %398 = vrot.lane.b32.xlu0 %v392, 64
        %v399 = vpop.permute.xlu0 %398
        %400 = vrot.lane.b32.xlu0 %v393, 64
        %v401 = vpop.permute.xlu0 %400
        %402 = vrot.lane.b32.xlu0 %v394, 64
        %v403 = vpop.permute.xlu0 %402
        %v407 = vadd.f32 %v388, %v399
        %v408 = vadd.f32 %v389, %v401
        %v409 = vadd.f32 %v390, %v403
        %vm410 = vcmask 261120
        %v411 = vsel %vm410, %v261, 0.0
        %412 = vadd.xlane.f32.xlu0 %v411
        %v413 = vpop.xlane.xlu0 %412
        %v414 = vsel %vm410, %v262, 0.0
        %415 = vadd.xlane.f32.xlu0 %v414
        %v416 = vpop.xlane.xlu0 %415
        %v417 = vsel %vm410, %v263, 0.0
        %418 = vadd.xlane.f32.xlu0 %v417
        %v419 = vpop.xlane.xlu0 %418
        %v420 = vrcp.pop 32.0
        %v421 = vmul.f32 32.0, %v420
        %v422 = vsub.f32 1.0, %v421
        %v423 = vmul.f32 %v420, %v422
        %v424 = vadd.f32 %v420, %v423
        %vm425 = vweird.f32 %v420
        %v426 = vsel %vm425, %v420, %v424
        %v427 = vmul.f32 %v413, %v426
        %v428 = vmul.f32 %v416, %v426
        %v429 = vmul.f32 %v419, %v426
        %v430 = vsub.f32 %v261, %v427
        %v431 = vsub.f32 %v262, %v428
        %v432 = vsub.f32 %v263, %v429
        %v433 = vmul.f32 %v430, %v430
        %v434 = vmul.f32 %v431, %v431
        %v435 = vmul.f32 %v432, %v432
        %v436 = vsel %vm410, %v433, 0.0
        %437 = vadd.xlane.f32.xlu0 %v436
        %v438 = vpop.xlane.xlu0 %437
        %v439 = vsel %vm410, %v434, 0.0
        %440 = vadd.xlane.f32.xlu0 %v439
        %v441 = vpop.xlane.xlu0 %440
        %v442 = vsel %vm410, %v435, 0.0
        %443 = vadd.xlane.f32.xlu0 %v442
        %v444 = vpop.xlane.xlu0 %443
        %v445 = vmul.f32 %v438, %v426
        %v446 = vmul.f32 %v441, %v426
        %v447 = vmul.f32 %v444, %v426
        %v448 = vadd.f32 %v445, 1e-05
        %v449 = vadd.f32 %v446, 1e-05
        %v450 = vadd.f32 %v447, 1e-05
        %v451 = vrsqrt.pop %v448
        %v452 = vmul.f32 %v451, %v448
        %v453 = vmul.f32 %v452, %v451
        %v454 = vmul.f32 0.5, %v453
        %v455 = vsub.f32 1.5, %v454
        %v456 = vmul.f32 %v451, %v455
        %vm457 = vweird.f32 %v448
        %vm458 = vweird.f32 %v451
        %vm459 = vmor %vm457, %vm458
        %v460 = vsel %vm459, %v451, %v456
        %v461 = vrsqrt.pop %v449
        %v462 = vmul.f32 %v461, %v449
        %v463 = vmul.f32 %v462, %v461
        %v464 = vmul.f32 0.5, %v463
        %v465 = vsub.f32 1.5, %v464
        %v466 = vmul.f32 %v461, %v465
        %vm467 = vweird.f32 %v449
        %vm468 = vweird.f32 %v461
        %vm469 = vmor %vm467, %vm468
        %v470 = vsel %vm469, %v461, %v466
        %v471 = vrsqrt.pop %v450
        %v472 = vmul.f32 %v471, %v450
        %v473 = vmul.f32 %v472, %v471
        %v474 = vmul.f32 0.5, %v473
        %v475 = vsub.f32 1.5, %v474
        %v476 = vmul.f32 %v471, %v475
        %vm477 = vweird.f32 %v450
        %vm478 = vweird.f32 %v471
        %vm479 = vmor %vm477, %vm478
        %v480 = vsel %vm479, %v471, %v476
        %v481 = vmul.f32 %v430, %v460
        %v482 = vmul.f32 %v431, %v470
        %v483 = vmul.f32 %v432, %v480
        %v484 = vperm.slane %v264, 0
        %v485 = vmul.f32 %v481, %v484
        %v486 = vmul.f32 %v482, %v484
        %v487 = vmul.f32 %v483, %v484
        %v488 = vperm.slane %v265, 0
        %v489 = vadd.f32 %v485, %v488
        %v490 = vadd.f32 %v486, %v488
        %v491 = vadd.f32 %v487, %v488
        %v492 = vadd.f32 %v407, 1.0
        %v493 = vadd.f32 %v408, 1.0
        %v494 = vadd.f32 %v409, 1.0
        %498 = vrot.lane.b32.xlu0 %v492, 96
        %v499 = vpop.permute.xlu0 %498
        %500 = vrot.lane.b32.xlu0 %v493, 96
        %v501 = vpop.permute.xlu0 %500
        %502 = vrot.lane.b32.xlu0 %v494, 96
        %v503 = vpop.permute.xlu0 %502
        %v507 = vmul.f32 %v489, %v499
        %v508 = vmul.f32 %v490, %v501
        %v509 = vmul.f32 %v491, %v503
        %v510 = vadd.f32 %v507, %v407
        %v511 = vadd.f32 %v508, %v408
        %v512 = vadd.f32 %v509, %v409
        %v513 = vld [vmem:[%s3] sm:$0xff]
        %v514 = vld [vmem:[%s3 + $0x10] sm:$0xff]
        %v515 = vld [vmem:[%s3 + $0x20] sm:$0xff]
        %v516 = vld [vmem:[%s3 + $0x30] sm:$0xff]
        %v518 = vsel %vm410, %v510, 0
        %v521 = vsel %vm410, %v511, 0
        %v524 = vsel %vm410, %v512, 0
        %526 = vmatpush.msra.mxu0 0.0
        %527 = vmatpush.msra.mxu0 0.0
        %528 = vmatpush.msra.mxu0 0.0
        %529 = vmatpush.msra.mxu0 0.0
        %530 = vmatpush.msra.mxu0 0.0
        %531 = vmatpush.msra.mxu0 0.0
        %532 = vmatpush.msra.mxu0 0.0
        %533 = vmatpush.msra.mxu0 0.0
        %534 = vmatpush.msra.mxu0 0.0
        %535 = vmatpush.msra.mxu0 0.0
        %536 = vmatpush.msra.mxu0 0.0
        %537 = vmatpush.msra.mxu0 0.0
        %538 = vmatpush.msra.mxu0 %v516
        %539 = vmatpush.msra.mxu0 %v515
        %540 = vmatpush.msra.mxu0 %v514
        %541 = vmatpush.msra.mxu0 %v513
        %542 = vmatmul.f32.gmra.mxu0 %v518
        %v543 = vpop.f32.mrf.mxu0
        %v544 = vadd.f32 0.0, %v543
        %545 = vmatmul.f32.gmra.mxu0 %v521
        %v546 = vpop.f32.mrf.mxu0
        %v547 = vadd.f32 0.0, %v546
        %548 = vmatmul.f32.gmra.mxu0 %v524
        %v549 = vpop.f32.mrf.mxu0
        %v550 = vadd.f32 0.0, %v549
        %551 = vdwg.mxu0
        %v552 = vld [vmem:[%s4 + $0x80] sm:$0xff]
        %v553 = vld [vmem:[%s4 + $0x88] sm:$0xff]
        %v554 = vld [vmem:[%s4 + $0x90] sm:$0xff]
        %v555 = vld [vmem:[%s4 + $0x98] sm:$0xff]
        %v557 = vsel %vm410, %v544, 0
        %v560 = vsel %vm410, %v547, 0
        %v563 = vsel %vm410, %v550, 0
        %565 = vmatpush.msra.mxu0 0.0
        %566 = vmatpush.msra.mxu0 0.0
        %567 = vmatpush.msra.mxu0 0.0
        %568 = vmatpush.msra.mxu0 0.0
        %569 = vmatpush.msra.mxu0 0.0
        %570 = vmatpush.msra.mxu0 0.0
        %571 = vmatpush.msra.mxu0 0.0
        %572 = vmatpush.msra.mxu0 0.0
        %573 = vmatpush.msra.mxu0 0.0
        %574 = vmatpush.msra.mxu0 0.0
        %575 = vmatpush.msra.mxu0 0.0
        %576 = vmatpush.msra.mxu0 0.0
        %577 = vmatpush.msra.mxu0 %v555
        %578 = vmatpush.msra.mxu0 %v554
        %579 = vmatpush.msra.mxu0 %v553
        %580 = vmatpush.msra.mxu0 %v552
        %581 = vmatmul.f32.gmra.mxu0 %v557
        %v582 = vpop.f32.mrf.mxu0
        %v583 = vadd.f32 0.0, %v582
        %584 = vmatmul.f32.gmra.mxu0 %v560
        %v585 = vpop.f32.mrf.mxu0
        %v586 = vadd.f32 0.0, %v585
        %587 = vmatmul.f32.gmra.mxu0 %v563
        %v588 = vpop.f32.mrf.mxu0
        %v589 = vadd.f32 0.0, %v588
        %590 = vdwg.mxu0
        %v591 = vsub.f32 %v544, %v583
        %v592 = vsub.f32 %v547, %v586
        %v593 = vsub.f32 %v550, %v589
        %v594 = vmul.f32 %v591, %v591
        %v595 = vmul.f32 %v592, %v592
        %v596 = vmul.f32 %v593, %v593
        %v598 = vsel %vm410, %v594, 0
        %v601 = vsel %vm410, %v595, 0
        %v604 = vsel %vm410, %v596, 0
        %606 = vmatpush.msra.mxu0 0.0
        %607 = vmatpush.msra.mxu0 0.0
        %608 = vmatpush.msra.mxu0 0.0
        %609 = vmatpush.msra.mxu0 0.0
        %610 = vmatpush.msra.mxu0 0.0
        %611 = vmatpush.msra.mxu0 0.0
        %612 = vmatpush.msra.mxu0 0.0
        %613 = vmatpush.msra.mxu0 0.0
        %614 = vmatpush.msra.mxu0 0.0
        %615 = vmatpush.msra.mxu0 0.0
        %616 = vmatpush.msra.mxu0 0.0
        %617 = vmatpush.msra.mxu0 0.0
        %618 = vmatpush.msra.mxu0 %v555
        %619 = vmatpush.msra.mxu0 %v554
        %620 = vmatpush.msra.mxu0 %v553
        %621 = vmatpush.msra.mxu0 %v552
        %622 = vmatmul.f32.gmra.mxu0 %v598
        %v623 = vpop.f32.mrf.mxu0
        %v624 = vadd.f32 1e-06, %v623
        %625 = vmatmul.f32.gmra.mxu0 %v601
        %v626 = vpop.f32.mrf.mxu0
        %v627 = vadd.f32 1e-06, %v626
        %628 = vmatmul.f32.gmra.mxu0 %v604
        %v629 = vpop.f32.mrf.mxu0
        %v630 = vadd.f32 1e-06, %v629
        %631 = vdwg.mxu0
        %v632 = vrsqrt.pop %v624
        %v633 = vmul.f32 %v632, %v624
        %v634 = vmul.f32 %v633, %v632
        %v635 = vmul.f32 0.5, %v634
        %v636 = vsub.f32 1.5, %v635
        %v637 = vmul.f32 %v632, %v636
        %vm638 = vweird.f32 %v624
        %vm639 = vweird.f32 %v632
        %vm640 = vmor %vm638, %vm639
        %v641 = vsel %vm640, %v632, %v637
        %v642 = vrsqrt.pop %v627
        %v643 = vmul.f32 %v642, %v627
        %v644 = vmul.f32 %v643, %v642
        %v645 = vmul.f32 0.5, %v644
        %v646 = vsub.f32 1.5, %v645
        %v647 = vmul.f32 %v642, %v646
        %vm648 = vweird.f32 %v627
        %vm649 = vweird.f32 %v642
        %vm650 = vmor %vm648, %vm649
        %v651 = vsel %vm650, %v642, %v647
        %v652 = vrsqrt.pop %v630
        %v653 = vmul.f32 %v652, %v630
        %v654 = vmul.f32 %v653, %v652
        %v655 = vmul.f32 0.5, %v654
        %v656 = vsub.f32 1.5, %v655
        %v657 = vmul.f32 %v652, %v656
        %vm658 = vweird.f32 %v630
        %vm659 = vweird.f32 %v652
        %vm660 = vmor %vm658, %vm659
        %v661 = vsel %vm660, %v652, %v657
        %v662 = vmul.f32 %v591, %v641
        %v663 = vmul.f32 %v592, %v651
        %v664 = vmul.f32 %v593, %v661
        %v665 = vperm.slane %v266, 0
        %v666 = vmul.f32 %v662, %v665
        %v667 = vmul.f32 %v663, %v665
        %v668 = vmul.f32 %v664, %v665
        %v669 = vperm.slane %v267, 0
        %v670 = vadd.f32 %v666, %v669
        %v671 = vadd.f32 %v667, %v669
        %v672 = vadd.f32 %v668, %v669
        %673 = vrot.lane.b32.xlu0 %v544, 96
        %v674 = vpop.permute.xlu0 %673
        %675 = vrot.lane.b32.xlu0 %v547, 96
        %v676 = vpop.permute.xlu0 %675
        %677 = vrot.lane.b32.xlu0 %v550, 96
        %v678 = vpop.permute.xlu0 %677
        %v679 = vsel %vm410, %v674, 0
        %v681 = vsel %vm410, %v676, 0
        %v683 = vsel %vm410, %v678, 0
        %685 = vmatpush.msra.mxu0 0.0
        %686 = vmatpush.msra.mxu0 0.0
        %687 = vmatpush.msra.mxu0 0.0
        %688 = vmatpush.msra.mxu0 0.0
        %689 = vmatpush.msra.mxu0 0.0
        %690 = vmatpush.msra.mxu0 0.0
        %691 = vmatpush.msra.mxu0 0.0
        %692 = vmatpush.msra.mxu0 0.0
        %693 = vmatpush.msra.mxu0 0.0
        %694 = vmatpush.msra.mxu0 0.0
        %695 = vmatpush.msra.mxu0 0.0
        %696 = vmatpush.msra.mxu0 0.0
        %697 = vmatpush.msra.mxu0 %v555
        %698 = vmatpush.msra.mxu0 %v554
        %699 = vmatpush.msra.mxu0 %v553
        %700 = vmatpush.msra.mxu0 %v552
        %701 = vmatmul.f32.gmra.mxu0 %v679
        %v702 = vpop.f32.mrf.mxu0
        %v703 = vadd.f32 0.0, %v702
        %704 = vmatmul.f32.gmra.mxu0 %v681
        %v705 = vpop.f32.mrf.mxu0
        %v706 = vadd.f32 0.0, %v705
        %707 = vmatmul.f32.gmra.mxu0 %v683
        %v708 = vpop.f32.mrf.mxu0
        %v709 = vadd.f32 0.0, %v708
        %710 = vdwg.mxu0
        %714 = vrot.lane.b32.xlu0 %v703, 32
        %v715 = vpop.permute.xlu0 %714
        %716 = vrot.lane.b32.xlu0 %v706, 32
        %v717 = vpop.permute.xlu0 %716
        %718 = vrot.lane.b32.xlu0 %v709, 32
        %v719 = vpop.permute.xlu0 %718
        %v723 = vsub.f32 %v544, %v715
        %v724 = vsub.f32 %v547, %v717
        %v725 = vsub.f32 %v550, %v719
        %v726 = vmul.f32 %v723, %v723
        %v727 = vmul.f32 %v724, %v724
        %v728 = vmul.f32 %v725, %v725
        %732 = vrot.lane.b32.xlu0 %v726, 96
        %v733 = vpop.permute.xlu0 %732
        %734 = vrot.lane.b32.xlu0 %v727, 96
        %v735 = vpop.permute.xlu0 %734
        %736 = vrot.lane.b32.xlu0 %v728, 96
        %v737 = vpop.permute.xlu0 %736
        %v738 = vsel %vm410, %v733, 0
        %v740 = vsel %vm410, %v735, 0
        %v742 = vsel %vm410, %v737, 0
        %744 = vmatpush.msra.mxu0 0.0
        %745 = vmatpush.msra.mxu0 0.0
        %746 = vmatpush.msra.mxu0 0.0
        %747 = vmatpush.msra.mxu0 0.0
        %748 = vmatpush.msra.mxu0 0.0
        %749 = vmatpush.msra.mxu0 0.0
        %750 = vmatpush.msra.mxu0 0.0
        %751 = vmatpush.msra.mxu0 0.0
        %752 = vmatpush.msra.mxu0 0.0
        %753 = vmatpush.msra.mxu0 0.0
        %754 = vmatpush.msra.mxu0 0.0
        %755 = vmatpush.msra.mxu0 0.0
        %756 = vmatpush.msra.mxu0 %v555
        %757 = vmatpush.msra.mxu0 %v554
        %758 = vmatpush.msra.mxu0 %v553
        %759 = vmatpush.msra.mxu0 %v552
        %760 = vmatmul.f32.gmra.mxu0 %v738
        %v761 = vpop.f32.mrf.mxu0
        %v762 = vadd.f32 1e-06, %v761
        %763 = vmatmul.f32.gmra.mxu0 %v740
        %v764 = vpop.f32.mrf.mxu0
        %v765 = vadd.f32 1e-06, %v764
        %766 = vmatmul.f32.gmra.mxu0 %v742
        %v767 = vpop.f32.mrf.mxu0
        %v768 = vadd.f32 1e-06, %v767
        %769 = vdwg.mxu0
        %v770 = vrsqrt.pop %v762
        %v771 = vmul.f32 %v770, %v762
        %v772 = vmul.f32 %v771, %v770
        %v773 = vmul.f32 0.5, %v772
        %v774 = vsub.f32 1.5, %v773
        %v775 = vmul.f32 %v770, %v774
        %vm776 = vweird.f32 %v762
        %vm777 = vweird.f32 %v770
        %vm778 = vmor %vm776, %vm777
        %v779 = vsel %vm778, %v770, %v775
        %v780 = vrsqrt.pop %v765
        %v781 = vmul.f32 %v780, %v765
        %v782 = vmul.f32 %v781, %v780
        %v783 = vmul.f32 0.5, %v782
        %v784 = vsub.f32 1.5, %v783
        %v785 = vmul.f32 %v780, %v784
        %vm786 = vweird.f32 %v765
        %vm787 = vweird.f32 %v780
        %vm788 = vmor %vm786, %vm787
        %v789 = vsel %vm788, %v780, %v785
        %v790 = vrsqrt.pop %v768
        %v791 = vmul.f32 %v790, %v768
        %v792 = vmul.f32 %v791, %v790
        %v793 = vmul.f32 0.5, %v792
        %v794 = vsub.f32 1.5, %v793
        %v795 = vmul.f32 %v790, %v794
        %vm796 = vweird.f32 %v768
        %vm797 = vweird.f32 %v790
        %vm798 = vmor %vm796, %vm797
        %v799 = vsel %vm798, %v790, %v795
        %803 = vrot.lane.b32.xlu0 %v779, 32
        %v804 = vpop.permute.xlu0 %803
        %805 = vrot.lane.b32.xlu0 %v789, 32
        %v806 = vpop.permute.xlu0 %805
        %807 = vrot.lane.b32.xlu0 %v799, 32
        %v808 = vpop.permute.xlu0 %807
        %v812 = vmul.f32 %v723, %v804
        %v813 = vmul.f32 %v724, %v806
        %v814 = vmul.f32 %v725, %v808
        %v815 = vperm.slane %v268, 0
        %817 = vrot.lane.b32.xlu0 %v815, 32
        %v818 = vpop.permute.xlu0 %817
        %v820 = vmul.f32 %v812, %v818
        %v821 = vmul.f32 %v813, %v818
        %v822 = vmul.f32 %v814, %v818
        %v823 = vperm.slane %v269, 0
        %825 = vrot.lane.b32.xlu0 %v823, 32
        %v826 = vpop.permute.xlu0 %825
        %v828 = vadd.f32 %v820, %v826
        %v829 = vadd.f32 %v821, %v826
        %v830 = vadd.f32 %v822, %v826
        %v831 = vld [vmem:[%s4 + $0xa0] sm:$0x1]
        %v832 = vperm.slane %v831, 0
        %v833 = vmul.f32 %v670, %v832
        %v834 = vmul.f32 %v671, %v832
        %v835 = vmul.f32 %v672, %v832
        %839 = vrot.lane.b32.xlu0 %v828, 96
        %v840 = vpop.permute.xlu0 %839
        %841 = vrot.lane.b32.xlu0 %v829, 96
        %v842 = vpop.permute.xlu0 %841
        %843 = vrot.lane.b32.xlu0 %v830, 96
        %v844 = vpop.permute.xlu0 %843
        %v846 = vsel %vm410, %v833, 0
        %v849 = vsel %vm410, %v834, 0
        %v852 = vsel %vm410, %v835, 0
        %v854 = vsel %vm410, %v840, 0
        %v856 = vsel %vm410, %v842, 0
        %v858 = vsel %vm410, %v844, 0
        %860 = vmatpush.xpose.msra.mxu0 0.0
        %861 = vmatpush.xpose.msra.mxu0 0.0
        %862 = vmatpush.xpose.msra.mxu0 0.0
        %863 = vmatpush.xpose.msra.mxu0 0.0
        %864 = vmatpush.xpose.msra.mxu0 0.0
        %865 = vmatpush.xpose.msra.mxu0 0.0
        %866 = vmatpush.xpose.msra.mxu0 0.0
        %867 = vmatpush.xpose.msra.mxu0 0.0
        %868 = vmatpush.xpose.msra.mxu0 0.0
        %869 = vmatpush.xpose.msra.mxu0 0.0
        %870 = vmatpush.xpose.msra.mxu0 0.0
        %871 = vmatpush.xpose.msra.mxu0 0.0
        %872 = vmatpush.xpose.msra.mxu0 0.0
        %873 = vmatpush.xpose.msra.mxu0 %v858
        %874 = vmatpush.xpose.msra.mxu0 %v856
        %875 = vmatpush.xpose.msra.mxu0 %v854
        %876 = vmatmul.f32.gmra.mxu0 %v846
        %v877 = vpop.f32.mrf.mxu0
        %v878 = vadd.f32 0.0, %v877
        %879 = vmatmul.f32.gmra.mxu0 %v849
        %v880 = vpop.f32.mrf.mxu0
        %v881 = vadd.f32 0.0, %v880
        %882 = vmatmul.f32.gmra.mxu0 %v852
        %v883 = vpop.f32.mrf.mxu0
        %v884 = vadd.f32 0.0, %v883
        %885 = vdwg.mxu0
        %vm886 = vcmask 195584
        %v887 = vsel %vm886, %v878, -inf
        %888 = vmax.xlane.f32.xlu0 %v887
        %v889 = vpop.xlane.xlu0 %888
        %v890 = vsel %vm886, %v881, -inf
        %891 = vmax.xlane.f32.xlu0 %v890
        %v892 = vpop.xlane.xlu0 %891
        %v893 = vsel %vm886, %v884, -inf
        %894 = vmax.xlane.f32.xlu0 %v893
        %v895 = vpop.xlane.xlu0 %894
        %v896 = vsub.f32 %v878, %v889
        %v897 = vsub.f32 %v881, %v892
        %v898 = vsub.f32 %v884, %v895
        %v899 = vmul.f32 %v896, 1.442695
        %v900 = vpow.pop %v899
        %v901 = vmul.f32 %v897, 1.442695
        %v902 = vpow.pop %v901
        %v903 = vmul.f32 %v898, 1.442695
        %v904 = vpow.pop %v903
        %v905 = vsel %vm886, %v900, 0.0
        %906 = vadd.xlane.f32.xlu0 %v905
        %v907 = vpop.xlane.xlu0 %906
        %v908 = vsel %vm886, %v902, 0.0
        %909 = vadd.xlane.f32.xlu0 %v908
        %v910 = vpop.xlane.xlu0 %909
        %v911 = vsel %vm886, %v904, 0.0
        %912 = vadd.xlane.f32.xlu0 %v911
        %v913 = vpop.xlane.xlu0 %912
        %v914 = vrcp.pop %v907
        %v915 = vrcp.pop %v910
        %v916 = vrcp.pop %v913
        %v917 = vmul.f32 %v900, %v914
        %v918 = vmul.f32 %v902, %v915
        %v919 = vmul.f32 %v904, %v916
        %921 = vrot.lane.b32.xlu0 %v832, 64
        %v922 = vpop.permute.xlu0 %921
        %v924 = vmul.f32 %v544, %v922
        %v925 = vmul.f32 %v547, %v922
        %v926 = vmul.f32 %v550, %v922
        %v927 = vld [vmem:[%s4 + $0xa1] sm:$0x1]
        %v928 = vperm.slane %v927, 0
        %v929 = vmul.f32 %v670, %v928
        %v930 = vmul.f32 %v671, %v928
        %v931 = vmul.f32 %v672, %v928
        %v933 = vsel %vm410, %v929, 0
        %v936 = vsel %vm410, %v930, 0
        %v939 = vsel %vm410, %v931, 0
        %941 = vmatpush.xpose.msra.mxu0 0.0
        %942 = vmatpush.xpose.msra.mxu0 0.0
        %943 = vmatpush.xpose.msra.mxu0 0.0
        %944 = vmatpush.xpose.msra.mxu0 0.0
        %945 = vmatpush.xpose.msra.mxu0 0.0
        %946 = vmatpush.xpose.msra.mxu0 0.0
        %947 = vmatpush.xpose.msra.mxu0 0.0
        %948 = vmatpush.xpose.msra.mxu0 0.0
        %949 = vmatpush.xpose.msra.mxu0 0.0
        %950 = vmatpush.xpose.msra.mxu0 0.0
        %951 = vmatpush.xpose.msra.mxu0 0.0
        %952 = vmatpush.xpose.msra.mxu0 0.0
        %953 = vmatpush.xpose.msra.mxu0 0.0
        %954 = vmatpush.xpose.msra.mxu0 %v858
        %955 = vmatpush.xpose.msra.mxu0 %v856
        %956 = vmatpush.xpose.msra.mxu0 %v854
        %957 = vmatmul.f32.gmra.mxu0 %v933
        %v958 = vpop.f32.mrf.mxu0
        %v959 = vadd.f32 0.0, %v958
        %960 = vmatmul.f32.gmra.mxu0 %v936
        %v961 = vpop.f32.mrf.mxu0
        %v962 = vadd.f32 0.0, %v961
        %963 = vmatmul.f32.gmra.mxu0 %v939
        %v964 = vpop.f32.mrf.mxu0
        %v965 = vadd.f32 0.0, %v964
        %966 = vdwg.mxu0
        %v967 = vsel %vm886, %v959, -inf
        %968 = vmax.xlane.f32.xlu0 %v967
        %v969 = vpop.xlane.xlu0 %968
        %v970 = vsel %vm886, %v962, -inf
        %971 = vmax.xlane.f32.xlu0 %v970
        %v972 = vpop.xlane.xlu0 %971
        %v973 = vsel %vm886, %v965, -inf
        %974 = vmax.xlane.f32.xlu0 %v973
        %v975 = vpop.xlane.xlu0 %974
        %v976 = vsub.f32 %v959, %v969
        %v977 = vsub.f32 %v962, %v972
        %v978 = vsub.f32 %v965, %v975
        %v979 = vmul.f32 %v976, 1.442695
        %v980 = vpow.pop %v979
        %v981 = vmul.f32 %v977, 1.442695
        %v982 = vpow.pop %v981
        %v983 = vmul.f32 %v978, 1.442695
        %v984 = vpow.pop %v983
        %v985 = vsel %vm886, %v980, 0.0
        %986 = vadd.xlane.f32.xlu0 %v985
        %v987 = vpop.xlane.xlu0 %986
        %v988 = vsel %vm886, %v982, 0.0
        %989 = vadd.xlane.f32.xlu0 %v988
        %v990 = vpop.xlane.xlu0 %989
        %v991 = vsel %vm886, %v984, 0.0
        %992 = vadd.xlane.f32.xlu0 %v991
        %v993 = vpop.xlane.xlu0 %992
        %v994 = vrcp.pop %v987
        %v995 = vrcp.pop %v990
        %v996 = vrcp.pop %v993
        %v997 = vmul.f32 %v980, %v994
        %v998 = vmul.f32 %v982, %v995
        %v999 = vmul.f32 %v984, %v996
        %1001 = vrot.lane.b32.xlu0 %v928, 64
        %v1002 = vpop.permute.xlu0 %1001
        %v1004 = vmul.f32 %v544, %v1002
        %v1005 = vmul.f32 %v547, %v1002
        %v1006 = vmul.f32 %v550, %v1002
        %1010 = vrot.lane.b32.xlu0 %v1004, 64
        %v1011 = vpop.permute.xlu0 %1010
        %1012 = vrot.lane.b32.xlu0 %v1005, 64
        %v1013 = vpop.permute.xlu0 %1012
        %1014 = vrot.lane.b32.xlu0 %v1006, 64
        %v1015 = vpop.permute.xlu0 %1014
        %v1020 = vsel %vm886, %v997, 0
        %v1023 = vsel %vm886, %v998, 0
        %v1026 = vsel %vm886, %v999, 0
        %1028 = vmatpush.msra.mxu0 0.0
        %1029 = vmatpush.msra.mxu0 0.0
        %1030 = vmatpush.msra.mxu0 0.0
        %1031 = vmatpush.msra.mxu0 0.0
        %1032 = vmatpush.msra.mxu0 0.0
        %1033 = vmatpush.msra.mxu0 0.0
        %1034 = vmatpush.msra.mxu0 0.0
        %1035 = vmatpush.msra.mxu0 0.0
        %1036 = vmatpush.msra.mxu0 0.0
        %1037 = vmatpush.msra.mxu0 0.0
        %1038 = vmatpush.msra.mxu0 0.0
        %1039 = vmatpush.msra.mxu0 0.0
        %1040 = vmatpush.msra.mxu0 0.0
        %1041 = vmatpush.msra.mxu0 %v1015
        %1042 = vmatpush.msra.mxu0 %v1013
        %1043 = vmatpush.msra.mxu0 %v1011
        %1044 = vmatmul.f32.gmra.mxu0 %v1020
        %v1045 = vpop.f32.mrf.mxu0
        %v1046 = vadd.f32 0.0, %v1045
        %1047 = vmatmul.f32.gmra.mxu0 %v1023
        %v1048 = vpop.f32.mrf.mxu0
        %v1049 = vadd.f32 0.0, %v1048
        %1050 = vmatmul.f32.gmra.mxu0 %v1026
        %v1051 = vpop.f32.mrf.mxu0
        %v1052 = vadd.f32 0.0, %v1051
        %1053 = vdwg.mxu0
        %1057 = vrot.lane.b32.xlu0 %v924, 64
        %v1058 = vpop.permute.xlu0 %1057
        %1059 = vrot.lane.b32.xlu0 %v925, 64
        %v1060 = vpop.permute.xlu0 %1059
        %1061 = vrot.lane.b32.xlu0 %v926, 64
        %v1062 = vpop.permute.xlu0 %1061
        %v1067 = vsel %vm886, %v917, 0
        %v1070 = vsel %vm886, %v918, 0
        %v1073 = vsel %vm886, %v919, 0
        %1075 = vmatpush.msra.mxu0 0.0
        %1076 = vmatpush.msra.mxu0 0.0
        %1077 = vmatpush.msra.mxu0 0.0
        %1078 = vmatpush.msra.mxu0 0.0
        %1079 = vmatpush.msra.mxu0 0.0
        %1080 = vmatpush.msra.mxu0 0.0
        %1081 = vmatpush.msra.mxu0 0.0
        %1082 = vmatpush.msra.mxu0 0.0
        %1083 = vmatpush.msra.mxu0 0.0
        %1084 = vmatpush.msra.mxu0 0.0
        %1085 = vmatpush.msra.mxu0 0.0
        %1086 = vmatpush.msra.mxu0 0.0
        %1087 = vmatpush.msra.mxu0 0.0
        %1088 = vmatpush.msra.mxu0 %v1062
        %1089 = vmatpush.msra.mxu0 %v1060
        %1090 = vmatpush.msra.mxu0 %v1058
        %1091 = vmatmul.f32.gmra.mxu0 %v1067
        %v1092 = vpop.f32.mrf.mxu0
        %v1093 = vadd.f32 %v1046, %v1092
        %1094 = vmatmul.f32.gmra.mxu0 %v1070
        %v1095 = vpop.f32.mrf.mxu0
        %v1096 = vadd.f32 %v1049, %v1095
        %1097 = vmatmul.f32.gmra.mxu0 %v1073
        %v1098 = vpop.f32.mrf.mxu0
        %v1099 = vadd.f32 %v1052, %v1098
        %1100 = vdwg.mxu0
        %v1101 = vld [vmem:[%s3 + $0x40] ss:$0 sm:$0xff]
        %1106 = vrot.lane.b32.xlu0 %v513, 32
        %v1107 = vpop.permute.xlu0 %1106
        %1108 = vrot.lane.b32.xlu0 %v514, 32
        %v1109 = vpop.permute.xlu0 %1108
        %1110 = vrot.lane.b32.xlu0 %v515, 32
        %v1111 = vpop.permute.xlu0 %1110
        %1112 = vrot.lane.b32.xlu0 %v516, 32
        %v1113 = vpop.permute.xlu0 %1112
        %1119 = vrot.lane.b32.xlu0 %v1101, 32
        %v1120 = vpop.permute.xlu0 %1119
        %v1123 = vsel %vm410, %v1093, 0
        %v1126 = vsel %vm410, %v1096, 0
        %v1129 = vsel %vm410, %v1099, 0
        %1131 = vmatpush.msra.mxu0 0.0
        %1132 = vmatpush.msra.mxu0 0.0
        %1133 = vmatpush.msra.mxu0 0.0
        %1134 = vmatpush.msra.mxu0 0.0
        %1135 = vmatpush.msra.mxu0 0.0
        %1136 = vmatpush.msra.mxu0 0.0
        %1137 = vmatpush.msra.mxu0 0.0
        %1138 = vmatpush.msra.mxu0 0.0
        %1139 = vmatpush.msra.mxu0 0.0
        %1140 = vmatpush.msra.mxu0 0.0
        %1141 = vmatpush.msra.mxu0 0.0
        %1142 = vmatpush.msra.mxu0 0.0
        %1143 = vmatpush.msra.mxu0 %v1113
        %1144 = vmatpush.msra.mxu0 %v1111
        %1145 = vmatpush.msra.mxu0 %v1109
        %1146 = vmatpush.msra.mxu0 %v1107
        %1147 = vmatmul.f32.gmra.mxu0 %v1123
        %v1148 = vpop.f32.mrf.mxu0
        %v1149 = vadd.f32 %v1120, %v1148
        %1150 = vmatmul.f32.gmra.mxu0 %v1126
        %v1151 = vpop.f32.mrf.mxu0
        %v1152 = vadd.f32 %v1120, %v1151
        %1153 = vmatmul.f32.gmra.mxu0 %v1129
        %v1154 = vpop.f32.mrf.mxu0
        %v1155 = vadd.f32 %v1120, %v1154
        %1156 = vdwg.mxu0
        %v1157 = vperm.slane %v369, 0
        %v1158 = vmul.f32 %v381, %v1157
        %v1159 = vmul.f32 %v382, %v1157
        %v1160 = vmul.f32 %v383, %v1157
        %1164 = vrot.lane.b32.xlu0 %v1158, 64
        %v1165 = vpop.permute.xlu0 %1164
        %1166 = vrot.lane.b32.xlu0 %v1159, 64
        %v1167 = vpop.permute.xlu0 %1166
        %1168 = vrot.lane.b32.xlu0 %v1160, 64
        %v1169 = vpop.permute.xlu0 %1168
        %v1173 = vadd.f32 %v388, %v1165
        %v1174 = vadd.f32 %v389, %v1167
        %v1175 = vadd.f32 %v390, %v1169
        %1179 = vrot.lane.b32.xlu0 %v1149, 64
        %v1180 = vpop.permute.xlu0 %1179
        %1181 = vrot.lane.b32.xlu0 %v1152, 64
        %v1182 = vpop.permute.xlu0 %1181
        %1183 = vrot.lane.b32.xlu0 %v1155, 64
        %v1184 = vpop.permute.xlu0 %1183
        %v1188 = vmul.f32 %v1173, %v1180
        %v1189 = vmul.f32 %v1174, %v1182
        %v1190 = vmul.f32 %v1175, %v1184
        %1194 = vrot.lane.b32.xlu0 %v1188, 64
        %v1195 = vpop.permute.xlu0 %1194
        %1196 = vrot.lane.b32.xlu0 %v1189, 64
        %v1197 = vpop.permute.xlu0 %1196
        %1198 = vrot.lane.b32.xlu0 %v1190, 64
        %v1199 = vpop.permute.xlu0 %1198
        %v1203 = vadd.f32 %v261, %v1195
        %v1204 = vadd.f32 %v262, %v1197
        %v1205 = vadd.f32 %v263, %v1199
        %v1206 = vld [vmem:[%s4 + $0xa4] sm:$0x1]
        %v1207 = vld [vmem:[%s4 + $0xa5] sm:$0x1]
        %v1208 = vmul.f32 %v384, %v391
        %v1209 = vmul.f32 %v385, %v391
        %v1210 = vmul.f32 %v386, %v391
        %v1211 = vadd.f32 %v1208, %v1165
        %v1212 = vadd.f32 %v1209, %v1167
        %v1213 = vadd.f32 %v1210, %v1169
        %v1214 = vsel %vm410, %v1203, 0.0
        %1215 = vadd.xlane.f32.xlu0 %v1214
        %v1216 = vpop.xlane.xlu0 %1215
        %v1217 = vsel %vm410, %v1204, 0.0
        %1218 = vadd.xlane.f32.xlu0 %v1217
        %v1219 = vpop.xlane.xlu0 %1218
        %v1220 = vsel %vm410, %v1205, 0.0
        %1221 = vadd.xlane.f32.xlu0 %v1220
        %v1222 = vpop.xlane.xlu0 %1221
        %v1223 = vmul.f32 %v1216, %v426
        %v1224 = vmul.f32 %v1219, %v426
        %v1225 = vmul.f32 %v1222, %v426
        %v1226 = vsub.f32 %v1203, %v1223
        %v1227 = vsub.f32 %v1204, %v1224
        %v1228 = vsub.f32 %v1205, %v1225
        %v1229 = vmul.f32 %v1226, %v1226
        %v1230 = vmul.f32 %v1227, %v1227
        %v1231 = vmul.f32 %v1228, %v1228
        %v1232 = vsel %vm410, %v1229, 0.0
        %1233 = vadd.xlane.f32.xlu0 %v1232
        %v1234 = vpop.xlane.xlu0 %1233
        %v1235 = vsel %vm410, %v1230, 0.0
        %1236 = vadd.xlane.f32.xlu0 %v1235
        %v1237 = vpop.xlane.xlu0 %1236
        %v1238 = vsel %vm410, %v1231, 0.0
        %1239 = vadd.xlane.f32.xlu0 %v1238
        %v1240 = vpop.xlane.xlu0 %1239
        %v1241 = vmul.f32 %v1234, %v426
        %v1242 = vmul.f32 %v1237, %v426
        %v1243 = vmul.f32 %v1240, %v426
        %v1244 = vadd.f32 %v1241, 1e-05
        %v1245 = vadd.f32 %v1242, 1e-05
        %v1246 = vadd.f32 %v1243, 1e-05
        %v1247 = vrsqrt.pop %v1244
        %v1248 = vmul.f32 %v1247, %v1244
        %v1249 = vmul.f32 %v1248, %v1247
        %v1250 = vmul.f32 0.5, %v1249
        %v1251 = vsub.f32 1.5, %v1250
        %v1252 = vmul.f32 %v1247, %v1251
        %vm1253 = vweird.f32 %v1244
        %vm1254 = vweird.f32 %v1247
        %vm1255 = vmor %vm1253, %vm1254
        %v1256 = vsel %vm1255, %v1247, %v1252
        %v1257 = vrsqrt.pop %v1245
        %v1258 = vmul.f32 %v1257, %v1245
        %v1259 = vmul.f32 %v1258, %v1257
        %v1260 = vmul.f32 0.5, %v1259
        %v1261 = vsub.f32 1.5, %v1260
        %v1262 = vmul.f32 %v1257, %v1261
        %vm1263 = vweird.f32 %v1245
        %vm1264 = vweird.f32 %v1257
        %vm1265 = vmor %vm1263, %vm1264
        %v1266 = vsel %vm1265, %v1257, %v1262
        %v1267 = vrsqrt.pop %v1246
        %v1268 = vmul.f32 %v1267, %v1246
        %v1269 = vmul.f32 %v1268, %v1267
        %v1270 = vmul.f32 0.5, %v1269
        %v1271 = vsub.f32 1.5, %v1270
        %v1272 = vmul.f32 %v1267, %v1271
        %vm1273 = vweird.f32 %v1246
        %vm1274 = vweird.f32 %v1267
        %vm1275 = vmor %vm1273, %vm1274
        %v1276 = vsel %vm1275, %v1267, %v1272
        %v1277 = vmul.f32 %v1226, %v1256
        %v1278 = vmul.f32 %v1227, %v1266
        %v1279 = vmul.f32 %v1228, %v1276
        %v1280 = vperm.slane %v1206, 0
        %v1281 = vmul.f32 %v1277, %v1280
        %v1282 = vmul.f32 %v1278, %v1280
        %v1283 = vmul.f32 %v1279, %v1280
        %v1284 = vperm.slane %v1207, 0
        %v1285 = vadd.f32 %v1281, %v1284
        %v1286 = vadd.f32 %v1282, %v1284
        %v1287 = vadd.f32 %v1283, %v1284
        %v1288 = vadd.f32 %v1211, 1.0
        %v1289 = vadd.f32 %v1212, 1.0
        %v1290 = vadd.f32 %v1213, 1.0
        %v1291 = vmul.f32 %v1285, %v1288
        %v1292 = vmul.f32 %v1286, %v1289
        %v1293 = vmul.f32 %v1287, %v1290
        %1297 = vrot.lane.b32.xlu0 %v1173, 32
        %v1298 = vpop.permute.xlu0 %1297
        %1299 = vrot.lane.b32.xlu0 %v1174, 32
        %v1300 = vpop.permute.xlu0 %1299
        %1301 = vrot.lane.b32.xlu0 %v1175, 32
        %v1302 = vpop.permute.xlu0 %1301
        %v1306 = vadd.f32 %v1291, %v1298
        %v1307 = vadd.f32 %v1292, %v1300
        %v1308 = vadd.f32 %v1293, %v1302
        %v1309 = vld [vmem:[%s3 + $0x8] sm:$0xff]
        %v1310 = vld [vmem:[%s3 + $0x18] sm:$0xff]
        %v1311 = vld [vmem:[%s3 + $0x28] sm:$0xff]
        %v1312 = vld [vmem:[%s3 + $0x38] sm:$0xff]
        %v1313 = vld [vmem:[%s3 + $0x48] ss:$0 sm:$0xff]
        %v1315 = vsel %vm410, %v1306, 0
        %v1318 = vsel %vm410, %v1307, 0
        %v1321 = vsel %vm410, %v1308, 0
        %1323 = vmatpush.msra.mxu0 0.0
        %1324 = vmatpush.msra.mxu0 0.0
        %1325 = vmatpush.msra.mxu0 0.0
        %1326 = vmatpush.msra.mxu0 0.0
        %1327 = vmatpush.msra.mxu0 0.0
        %1328 = vmatpush.msra.mxu0 0.0
        %1329 = vmatpush.msra.mxu0 0.0
        %1330 = vmatpush.msra.mxu0 0.0
        %1331 = vmatpush.msra.mxu0 0.0
        %1332 = vmatpush.msra.mxu0 0.0
        %1333 = vmatpush.msra.mxu0 0.0
        %1334 = vmatpush.msra.mxu0 0.0
        %1335 = vmatpush.msra.mxu0 %v1312
        %1336 = vmatpush.msra.mxu0 %v1311
        %1337 = vmatpush.msra.mxu0 %v1310
        %1338 = vmatpush.msra.mxu0 %v1309
        %1339 = vmatmul.f32.gmra.mxu0 %v1315
        %v1340 = vpop.f32.mrf.mxu0
        %v1341 = vadd.f32 %v1313, %v1340
        %1342 = vmatmul.f32.gmra.mxu0 %v1318
        %v1343 = vpop.f32.mrf.mxu0
        %v1344 = vadd.f32 %v1313, %v1343
        %1345 = vmatmul.f32.gmra.mxu0 %v1321
        %v1346 = vpop.f32.mrf.mxu0
        %v1347 = vadd.f32 %v1313, %v1346
        %1348 = vdwg.mxu0
        %v1349 = vmul.f32 %v1341, 0.5
        %v1350 = vmul.f32 %v1344, 0.5
        %v1351 = vmul.f32 %v1347, 0.5
        %v1352 = vmul.f32 %v1341, 0.044715
        %v1353 = vmul.f32 %v1344, 0.044715
        %v1354 = vmul.f32 %v1347, 0.044715
        %v1355 = vmul.f32 %v1352, %v1341
        %v1356 = vmul.f32 %v1353, %v1344
        %v1357 = vmul.f32 %v1354, %v1347
        %v1358 = vmul.f32 %v1355, %v1341
        %v1359 = vmul.f32 %v1356, %v1344
        %v1360 = vmul.f32 %v1357, %v1347
        %v1361 = vadd.f32 %v1341, %v1358
        %v1362 = vadd.f32 %v1344, %v1359
        %v1363 = vadd.f32 %v1347, %v1360
        %v1364 = vmul.f32 %v1361, 0.7978846
        %v1365 = vmul.f32 %v1362, 0.7978846
        %v1366 = vmul.f32 %v1363, 0.7978846
        %v1367 = vtanh.pop %v1364
        %v1368 = vtanh.pop %v1365
        %v1369 = vtanh.pop %v1366
        %v1370 = vadd.f32 %v1367, 1.0
        %v1371 = vadd.f32 %v1368, 1.0
        %v1372 = vadd.f32 %v1369, 1.0
        %v1373 = vmul.f32 %v1349, %v1370
        %v1374 = vmul.f32 %v1350, %v1371
        %v1375 = vmul.f32 %v1351, %v1372
        %v1376 = vld [vmem:[%s4] sm:$0xff]
        %v1377 = vld [vmem:[%s4 + $0x8] sm:$0xff]
        %v1378 = vld [vmem:[%s4 + $0x10] sm:$0xff]
        %v1379 = vld [vmem:[%s4 + $0x18] sm:$0xff]
        %v1380 = vld [vmem:[%s4 + $0x20] sm:$0xff]
        %v1381 = vld [vmem:[%s4 + $0x28] sm:$0xff]
        %v1382 = vld [vmem:[%s4 + $0x30] sm:$0xff]
        %v1383 = vld [vmem:[%s4 + $0x38] sm:$0xff]
        %v1384 = vld [vmem:[%s4 + $0x40] sm:$0xff]
        %v1385 = vld [vmem:[%s4 + $0x48] sm:$0xff]
        %v1386 = vld [vmem:[%s4 + $0x50] sm:$0xff]
        %v1387 = vld [vmem:[%s4 + $0x58] sm:$0xff]
        %v1388 = vld [vmem:[%s4 + $0x60] sm:$0xff]
        %v1389 = vld [vmem:[%s4 + $0x68] sm:$0xff]
        %v1390 = vld [vmem:[%s4 + $0x70] sm:$0xff]
        %v1391 = vld [vmem:[%s4 + $0x78] sm:$0xff]
        %1392 = vmatpush.msra.mxu0 %v1391
        %1393 = vmatpush.msra.mxu0 %v1390
        %1394 = vmatpush.msra.mxu0 %v1389
        %1395 = vmatpush.msra.mxu0 %v1388
        %1396 = vmatpush.msra.mxu0 %v1387
        %1397 = vmatpush.msra.mxu0 %v1386
        %1398 = vmatpush.msra.mxu0 %v1385
        %1399 = vmatpush.msra.mxu0 %v1384
        %1400 = vmatpush.msra.mxu0 %v1383
        %1401 = vmatpush.msra.mxu0 %v1382
        %1402 = vmatpush.msra.mxu0 %v1381
        %1403 = vmatpush.msra.mxu0 %v1380
        %1404 = vmatpush.msra.mxu0 %v1379
        %1405 = vmatpush.msra.mxu0 %v1378
        %1406 = vmatpush.msra.mxu0 %v1377
        %1407 = vmatpush.msra.mxu0 %v1376
        %1408 = vmatmul.f32.gmra.mxu0 %v1373
        %v1409 = vpop.f32.mrf.mxu0
        %v1410 = vadd.f32 %v1101, %v1409
        %1411 = vmatmul.f32.gmra.mxu0 %v1374
        %v1412 = vpop.f32.mrf.mxu0
        %v1413 = vadd.f32 %v1101, %v1412
        %1414 = vmatmul.f32.gmra.mxu0 %v1375
        %v1415 = vpop.f32.mrf.mxu0
        %v1416 = vadd.f32 %v1101, %v1415
        %1417 = vdwg.mxu0
        %1421 = vrot.lane.b32.xlu0 %v1410, 32
        %v1422 = vpop.permute.xlu0 %1421
        %1423 = vrot.lane.b32.xlu0 %v1413, 32
        %v1424 = vpop.permute.xlu0 %1423
        %1425 = vrot.lane.b32.xlu0 %v1416, 32
        %v1426 = vpop.permute.xlu0 %1425
        %v1430 = vmul.f32 %v1211, %v1422
        %v1431 = vmul.f32 %v1212, %v1424
        %v1432 = vmul.f32 %v1213, %v1426
        %1436 = vrot.lane.b32.xlu0 %v1430, 96
        %v1437 = vpop.permute.xlu0 %1436
        %1438 = vrot.lane.b32.xlu0 %v1431, 96
        %v1439 = vpop.permute.xlu0 %1438
        %1440 = vrot.lane.b32.xlu0 %v1432, 96
        %v1441 = vpop.permute.xlu0 %1440
        %v1445 = vadd.f32 %v1203, %v1437
        %v1446 = vadd.f32 %v1204, %v1439
        %v1447 = vadd.f32 %v1205, %v1441
        %1448 = vst.msk [vmem:[%s255] sm:$0xff] %vm410, %v1445
        %1449 = vst.msk [vmem:[%s248] sm:$0xff] %vm410, %v1446
        %1450 = vst.msk [vmem:[%s248 + $0x8] sm:$0xff] %vm410, %v1447
        %s1451 = sand.u32 %s142, 1
        %s1452 = scalar_lea.sflag [#allocation3], %s1451
        %s1453 = sand.u32 %s142, 1
        %s1454 = smul.addr %s1453, 16
        %s1455 = scalar_lea.vmem [#allocation2], %s1454
        %s1456 = sand.u32 %s168, 1
        %s1457 = scalar_lea.sflag [#allocation5], %s1456
        %s1458 = sand.u32 %s168, 1
        %s1459 = smul.addr %s1458, 8
        %s1460 = scalar_lea.vmem [#allocation4], %s1459
        // Predicated region
        $region41: #{tpu_custom_call.1} parent=39 // pred_check
          %p1461 = pneg %p152
        $region42: #{tpu_custom_call.1} parent=39 // pred_check_branch
          %1463 = sbr.rel (%p1461) target = $region44
        $region43: #{tpu_custom_call.1} parent=39 // pred_region
          %1465 = vsyncadd %s1452, 0
          %s1466 = smul.addr %s24, 2
          %s1467 = smul.addr %s1466, 8
          %s1468 = scalar_lea.hbm %s5, %s1467
          %s1469 = sshll.u32 %s1455, 4
          %s1470 = int_to_ptr.vmem [resolvable:$true] %s1469
          %s1471 = sshll.u32 %s1468, 4
          %s1472 = int_to_ptr.hbm [resolvable:$true] %s1471
          %1477 = dma.vmem_to_hbm [thread:$0]  %s1470, 256, %s1472, %s1452, 128, 128, 8
        $region44: #{tpu_custom_call.1} parent=39 // pred_fallthru
          _
        // Predicated region
        $region45: #{tpu_custom_call.1} parent=39 // pred_check
          %p1478 = pneg %p178
        $region46: #{tpu_custom_call.1} parent=39 // pred_check_branch
          %1480 = sbr.rel (%p1478) target = $region48
        $region47: #{tpu_custom_call.1} parent=39 // pred_region
          %1482 = vsyncadd %s1457, 0
          %s1483 = smul.addr %s24, 8
          %s1484 = scalar_lea.hbm %s6, %s1483
          %s1486 = sshll.u32 %s1460, 4
          %s1487 = int_to_ptr.vmem [resolvable:$true] %s1486
          %s1488 = sshll.u32 %s1484, 4
          %s1489 = int_to_ptr.hbm [resolvable:$true] %s1488
          %1491 = dma.vmem_to_hbm [thread:$0]  %s1487, 128, %s1489, %s1457
        $region48: #{tpu_custom_call.1} parent=39 // pred_fallthru
          _
      $region40: #{tpu_custom_call.1} parent=5 // pred_fallthru
        _
      %p1492 = scmp.le.s32.totalorder 2, %s19
      // Predicated region
      $region49: #{tpu_custom_call.1} parent=5 // pred_check
        %p1493 = pneg %p1492
      $region50: #{tpu_custom_call.1} parent=5 // pred_check_branch
        %1495 = sbr.rel (%p1493) target = $region52
      $region51: #{tpu_custom_call.1} parent=5 // pred_region
        %s1496 = ssub.s32 %s19, 2
        // Predicated region
        $region53: #{tpu_custom_call.1} parent=51 // pred_check
          %p1497 = pneg %p158
        $region54: #{tpu_custom_call.1} parent=51 // pred_check_branch
          %1499 = sbr.rel (%p1497) target = $region56
        $region55: #{tpu_custom_call.1} parent=51 // pred_region
          %s1500 = sand.u32 %s143, 1
          %s1501 = scalar_lea.sflag [#allocation3], %s1500
          %s1502 = sand.u32 %s143, 1
          %s1503 = smul.addr %s1502, 16
          %s1504 = scalar_lea.vmem [#allocation2], %s1503
          %1506 = dma.done %s1501, 256
        $region56: #{tpu_custom_call.1} parent=51 // pred_fallthru
          _
        // Predicated region
        $region57: #{tpu_custom_call.1} parent=51 // pred_check
          %p1507 = pneg %p184
        $region58: #{tpu_custom_call.1} parent=51 // pred_check_branch
          %1509 = sbr.rel (%p1507) target = $region60
        $region59: #{tpu_custom_call.1} parent=51 // pred_region
          %s1510 = sand.u32 %s169, 1
          %s1511 = scalar_lea.sflag [#allocation5], %s1510
          %s1512 = sand.u32 %s169, 1
          %s1513 = smul.addr %s1512, 8
          %s1514 = scalar_lea.vmem [#allocation4], %s1513
          %1516 = dma.done %s1511, 128
        $region60: #{tpu_custom_call.1} parent=51 // pred_fallthru
          _
      $region52: #{tpu_custom_call.1} parent=5 // pred_fallthru
        _
    $region6: #{tpu_custom_call.1} parent=1 // loop_footer
      %s23 = sadd.s32 1, %s19
    $region7: #{tpu_custom_call.1} parent=1 // loop_footer_branch
      %18 = sbr.rel target = $region3
    $region8: #{tpu_custom_call.1} parent=1 // loop_exit
      _
    %1517 = vsyncpa [#allocation3], 1
    %s1518 = scalar_lea.sflag [#allocation3], 1
    %1519 = vsyncpa %s1518, 1
    %1520 = vsyncpa [#allocation5], 1
    %s1521 = scalar_lea.sflag [#allocation5], 1
    %1522 = vsyncpa %s1521, 1

</llo_original>
